<compile_context>
chip_gen: v6e
topology: v6e:2x2x1
jax: 0.10.0
libtpu: 0.0.40
codegen_flags: <defaults>
</compile_context>

<pallas_src>
import jax
import jax.numpy as jnp
from jax import lax
from jax.experimental import pallas as pl
from jax.experimental.pallas import tpu as pltpu

EPS = 1e-5
LANES = 128
# MXU input dtype (accumulation is always f32).  bf16 per the perf review
# (~3x MXU throughput); set to jnp.float32 for exact f32 math.
COMPUTE_DTYPE = jnp.bfloat16
# dtype of the y1/y2 HBM intermediates between passes (halves handoff traffic).
INTERMEDIATE_DTYPE = jnp.bfloat16


def _round_up(x, m):
    return (x + m - 1) // m * m


def _vmem_limit_bytes():
    """Generation-dependent VMEM budget: ~3/4 of physical capacity.

    v5e/v6e (128 MiB) -> 96 MiB, v7x (64 MiB) -> 48 MiB.  Falls back to the
    v7x-safe 48 MiB if the hardware query is unavailable.
    """
    cap = None
    try:
        cap = getattr(pltpu.get_tpu_info(), "vmem_capacity_bytes", None)
    except Exception:
        cap = None
    if not cap:
        return 48 * 1024 * 1024
    return min(int(cap) * 3 // 4, 112 * 1024 * 1024)


def _compiler_params():
    return pltpu.CompilerParams(
        dimension_semantics=("parallel",),      # batch axis -> megacore / 2 TCs
        vmem_limit_bytes=_vmem_limit_bytes(),
    )


def _shift(x, delta, axis):
    """out[..., i, ...] = x[..., i + delta, ...]; zero outside (delta in {-1,0,1})."""
    if delta == 0:
        return x
    size = x.shape[axis]
    zshape = list(x.shape)
    zshape[axis] = 1
    zero = jnp.zeros(zshape, x.dtype)
    if delta == 1:
        return jnp.concatenate(
            [lax.slice_in_dim(x, 1, size, axis=axis), zero], axis=axis)
    return jnp.concatenate(
        [zero, lax.slice_in_dim(x, 0, size - 1, axis=axis)], axis=axis)


def _conv3x3(h, w_ref):
    """3x3 conv, padding=1, as 3 accumulated K=3*C MXU matmuls (kh loop).

    h     : (H, W, C) activation, already in the MXU input dtype.
    w_ref : (9*C, Cout) packed weights, rows ordered (kh, kw, ci), kh major.
    Returns the (H*W, Cout) f32 accumulator.

    Only one 3-tap (H*W, 3*C) row-patch is live per iteration (3x the
    activation instead of the 9x full im2col); the per-kh weight chunk is read
    from VMEM inside the loop to keep vreg pressure low.
    """
    H, W, C = h.shape
    acc = None
    for kh in range(3):                      # static 3-iteration loop
        hh = _shift(h, kh - 1, axis=0)
        taps = [_shift(hh, kw - 1, axis=1) for kw in range(3)]
        patch = jnp.concatenate(taps, axis=-1).reshape(H * W, 3 * C)
        w_chunk = w_ref[pl.ds(kh * 3 * C, 3 * C), :]
        part = jnp.dot(patch, w_chunk, preferred_element_type=jnp.float32)
        acc = part if acc is None else acc + part
    return acc


def _bn_partials(acc, cout):
    """Rows 0/1 = per-sample sum / sum-of-squares of the f32 accumulator."""
    s = jnp.sum(acc, axis=0, keepdims=True)
    ss = jnp.sum(acc * acc, axis=0, keepdims=True)
    return jnp.concatenate([s, ss, jnp.zeros((6, cout), jnp.float32)], axis=0)


# ------------------------- Pass 1: maxpool + conv1 ---------------------------
def _pool_conv1_kernel(x_ref, w1_ref, y1_ref, s1_ref):
    """MaxPool2d(2) + Conv1 (pre-BN) + per-sample BN1 partial sums.

    x_ref : (H, W, Cp)     one batch element, NHWC, channels padded to Cp
    w1_ref: (9*Cp, C1p)    packed conv1 weights, rows ordered (kh, kw, ci)
    y1_ref: (Hp, Wp, C1p)  conv1 pre-activation (bf16)
    s1_ref: (8, C1p)       rows 0/1 = per-sample sum / sum-of-squares (f32)
    """
    H, W, Cp = x_ref.shape
    Hp, Wp = H // 2, W // 2
    C1p = w1_ref.shape[1]

    # MaxPool 2x2 stride 2: strided reads over W, pairwise max over H.
    w_even = x_ref[:, pl.ds(0, Wp, 2), :]                    # x[:, 0::2, :]
    w_odd = x_ref[:, pl.ds(1, Wp, 2), :]                     # x[:, 1::2, :]
    wmax = jnp.maximum(w_even, w_odd)                        # (H, Wp, Cp)
    pooled = jnp.max(wmax.reshape(Hp, 2, Wp, Cp), axis=1)    # (Hp, Wp, Cp)

    # Cast to the MXU input dtype *before* the im2col shifts (perf review #1).
    acc = _conv3x3(pooled.astype(w1_ref.dtype), w1_ref)
    # NOTE: conv bias omitted -- it cancels exactly under train-mode BatchNorm.

    y1_ref[...] = acc.reshape(Hp, Wp, C1p).astype(y1_ref.dtype)
    s1_ref[...] = _bn_partials(acc, C1p)     # stats from the f32 acc (exact)


# --------------------- Pass 2: BN1 + ReLU + conv2 ----------------------------
def _bn1_conv2_kernel(y1_ref, sc1_ref, sh1_ref, w2_ref, y2_ref, s2_ref):
    """Folded BN1 affine (f32) + ReLU + Conv2 (pre-BN) + per-sample BN2 partials."""
    Hp, Wp, C1p = y1_ref.shape
    C2p = w2_ref.shape[1]

    h = jnp.maximum(
        y1_ref[...].astype(jnp.float32) * sc1_ref[...] + sh1_ref[...], 0.0)
    acc = _conv3x3(h.astype(w2_ref.dtype), w2_ref)

    y2_ref[...] = acc.reshape(Hp, Wp, C2p).astype(y2_ref.dtype)
    s2_ref[...] = _bn_partials(acc, C2p)


def _bn_fold(stats, gamma_p, beta_p, count):
    """stats: (N, 8, Cp), rows 0/1 = per-sample sum / sumsq.  Returns the folded
    BN affine (scale, shift), each (1, Cp), so that y_bn = y * scale + shift."""
    total = jnp.sum(stats[:, 0, :], axis=0)
    total_sq = jnp.sum(stats[:, 1, :], axis=0)
    mean = total / count
    # One-pass E[x^2]-E[x]^2 in f32; the clamp guards the tiny negative values
    # cancellation can produce.  TODO(synk): shifted / Welford-style combine
    # of per-row-tile sums if tolerances tighten at large spatial sizes.
    var = jnp.maximum(total_sq / count - mean * mean, 0.0)
    inv = lax.rsqrt(var + EPS)
    scale = gamma_p * inv
    shift = beta_p - mean * scale
    return scale.reshape(1, -1), shift.reshape(1, -1)


def down_forward(x_nchw, params):
    """Down(in_ch, out_ch).forward: NCHW in -> NCHW out (training-mode BN)."""
    w1, b1, g1, be1, w2, b2, g2, be2 = params     # w*: (3, 3, Cin, Cout) HWIO
    del b1, b2  # conv bias is mathematically cancelled by train-mode BN
    N, Cin, H, W = x_nchw.shape
    Hp, Wp = H // 2, W // 2
    # nn.MaxPool2d(2) floors odd sizes; drop the remainder row/col up front.
    x_nchw = x_nchw[:, :, :2 * Hp, :2 * Wp]
    H, W = 2 * Hp, 2 * Wp
    C1, C2 = w1.shape[-1], w2.shape[-1]
    Cip, C1p, C2p = (_round_up(c, LANES) for c in (Cin, C1, C2))

    # NCHW -> NHWC, channels zero-padded to a multiple of 128 (lane-dense
    # loads/stores in the kernels).
    # TODO(synk): in an all-Pallas NHWC UNet these transposes/pads disappear;
    #             for 9*Cin <= 128 keep x unpadded and pack the 9 taps x Cin
    #             into one <=128-lane K block instead of padding Cin.
    x = jnp.transpose(x_nchw, (0, 2, 3, 1)).astype(jnp.float32)
    x = jnp.pad(x, ((0, 0), (0, 0), (0, 0), (0, Cip - Cin)))

    def pack_w(w, cip, cop):
        ci, co = w.shape[2], w.shape[3]
        wp = jnp.zeros((3, 3, cip, cop), COMPUTE_DTYPE)
        wp = wp.at[:, :, :ci, :co].set(w.astype(COMPUTE_DTYPE))
        return wp.reshape(9 * cip, cop)          # rows ordered (kh, kw, ci)

    w1p = pack_w(w1, Cip, C1p)
    w2p = pack_w(w2, C1p, C2p)
    pad_vec = lambda v, cp: jnp.zeros((cp,), jnp.float32).at[:v.shape[0]].set(
        v.astype(jnp.float32))
    g1p, be1p = pad_vec(g1, C1p), pad_vec(be1, C1p)
    g2p, be2p = pad_vec(g2, C2p), pad_vec(be2, C2p)
    count = jnp.float32(N * Hp * Wp)
    cparams = _compiler_params()

    # ---- Pass 1: maxpool + conv1 + BN1 partial sums -------------------------
    y1, s1 = pl.pallas_call(
        _pool_conv1_kernel,
        grid=(N,),
        in_specs=[
            pl.BlockSpec((None, H, W, Cip), lambda n: (n, 0, 0, 0)),
            pl.BlockSpec((9 * Cip, C1p), lambda n: (0, 0)),
        ],
        out_specs=(
            pl.BlockSpec((None, Hp, Wp, C1p), lambda n: (n, 0, 0, 0)),
            pl.BlockSpec((None, 8, C1p), lambda n: (n, 0, 0)),
        ),
        out_shape=(
            jax.ShapeDtypeStruct((N, Hp, Wp, C1p), INTERMEDIATE_DTYPE),
            jax.ShapeDtypeStruct((N, 8, C1p), jnp.float32),
        ),
        compiler_params=cparams,
    )(x, w1p)

    sc1, sh1 = _bn_fold(s1, g1p, be1p, count)

    # ---- Pass 2: BN1 + ReLU + conv2 + BN2 partial sums ----------------------
    y2, s2 = pl.pallas_call(
        _bn1_conv2_kernel,
        grid=(N,),
        in_specs=[
            pl.BlockSpec((None, Hp, Wp, C1p), lambda n: (n, 0, 0, 0)),
            pl.BlockSpec((1, C1p), lambda n: (0, 0)),
            pl.BlockSpec((1, C1p), lambda n: (0, 0)),
            pl.BlockSpec((9 * C1p, C2p), lambda n: (0, 0)),
        ],
        out_specs=(
            pl.BlockSpec((None, Hp, Wp, C2p), lambda n: (n, 0, 0, 0)),
            pl.BlockSpec((None, 8, C2p), lambda n: (n, 0, 0)),
        ),
        out_shape=(
            jax.ShapeDtypeStruct((N, Hp, Wp, C2p), INTERMEDIATE_DTYPE),
            jax.ShapeDtypeStruct((N, 8, C2p), jnp.float32),
        ),
        compiler_params=cparams,
    )(y1, sc1, sh1, w2p)

    sc2, sh2 = _bn_fold(s2, g2p, be2p, count)

    # ---- Epilogue: BN2 + ReLU fused (by XLA) with the channel un-pad and the
    # NHWC -> NCHW transpose -- one elementwise+transpose pass touching only
    # the real C2 channels (replaces the old standalone pass-3 kernel).
    y2r = y2[..., :C2].astype(jnp.float32)
    out_nhwc = jnp.maximum(y2r * sc2[0, :C2] + sh2[0, :C2], 0.0)
    return jnp.transpose(out_nhwc, (0, 3, 1, 2))


def down_reference(x, params, conv_dtype=jnp.float32):
    """Pure-JAX transcription of the PyTorch forward (NCHW, training-mode BN).

    conv_dtype is the dtype conv inputs/weights are rounded to before the
    f32-accumulated convolution (mirrors the kernel's MXU input dtype).
    """
    w1, b1, g1, be1, w2, b2, g2, be2 = params
    xp = lax.reduce_window(x, -jnp.inf, lax.max,
                           (1, 1, 2, 2), (1, 1, 2, 2), 'VALID')

    def conv_bn_relu(h, w, b, g, be):
        y = lax.conv_general_dilated(
            h.astype(conv_dtype), w.astype(conv_dtype), (1, 1),
            ((1, 1), (1, 1)),
            dimension_numbers=('NCHW', 'HWIO', 'NCHW'),
            preferred_element_type=jnp.float32)
        y = y + b[None, :, None, None]
        m = jnp.mean(y, axis=(0, 2, 3), keepdims=True)
        v = jnp.mean(jnp.square(y - m), axis=(0, 2, 3), keepdims=True)
        y = (y - m) * lax.rsqrt(v + EPS) * g[None, :, None, None] \
            + be[None, :, None, None]
        return jnp.maximum(y, 0.0)

    h = conv_bn_relu(xp, w1, b1, g1, be1)
    return conv_bn_relu(h, w2, b2, g2, be2)


if __name__ == "__main__":
    key = jax.random.PRNGKey(0)
    ks = jax.random.split(key, 9)
    N, Cin, Cout, H, W = 2, 4, 6, 16, 16          # Down(4, 6) on a 2x4x16x16

    x = jax.random.normal(ks[0], (N, Cin, H, W), jnp.float32)
    w1 = 0.2 * jax.random.normal(ks[1], (3, 3, Cin, Cout), jnp.float32)
    b1 = 0.1 * jax.random.normal(ks[2], (Cout,), jnp.float32)
    g1 = 1.0 + 0.1 * jax.random.normal(ks[3], (Cout,), jnp.float32)
    be1 = 0.1 * jax.random.normal(ks[4], (Cout,), jnp.float32)
    w2 = 0.2 * jax.random.normal(ks[5], (3, 3, Cout, Cout), jnp.float32)
    b2 = 0.1 * jax.random.normal(ks[6], (Cout,), jnp.float32)
    g2 = 1.0 + 0.1 * jax.random.normal(ks[7], (Cout,), jnp.float32)
    be2 = 0.1 * jax.random.normal(ks[8], (Cout,), jnp.float32)
    params = (w1, b1, g1, be1, w2, b2, g2, be2)

    out = jax.block_until_ready(jax.jit(down_forward)(x, params))
    assert out.shape == (N, Cout, H // 2, W // 2), out.shape

    # Reference uses the same MXU input dtype (bf16 conv inputs, f32 accum);
    # the remaining delta comes from storing the y1/y2 intermediates in bf16
    # (<= ~2% of their magnitude).  The conv bias cancels exactly under
    # train-mode BN, so dropping it in the kernel does not change the result.
    ref = down_reference(x, params, conv_dtype=COMPUTE_DTYPE)
    err = float(jnp.max(jnp.abs(out - ref)))
    assert err < 5e-2, f"max abs error {err}"

    print("KERNEL_OK")
</pallas_src>

<mosaic_0001>
module attributes {stable_mosaic.version = 11 : i64} {
  func.func @_pool_conv1_kernel(%arg0: i32, %arg1: memref<1x16x16x128xf32, #tpu.memory_space<vmem>>, %arg2: memref<1152x128xbf16, #tpu.memory_space<vmem>>, %arg3: memref<1x8x8x128xbf16, #tpu.memory_space<vmem>>, %arg4: memref<1x8x128xf32, #tpu.memory_space<vmem>>) attributes {dimension_semantics = [#tpu.dimension_semantics<parallel>], iteration_bounds = array<i64: 2>, scalar_prefetch = 0 : i64, scratch_operands = 0 : i64, tpu.core_type = #tpu.core_type<tc>, window_params = [{transform_indices = @transform_0, window_bounds = array<i64: 1, 16, 16, 128>}, {pipeline_mode = #tpu.pipeline_mode<synchronous>, transform_indices = @transform_1, window_bounds = array<i64: 1152, 128>}, {transform_indices = @transform_2, window_bounds = array<i64: 1, 8, 8, 128>}, {transform_indices = @transform_3, window_bounds = array<i64: 1, 8, 128>}]} {
    %c0 = arith.constant 0 : index
    %c0_0 = arith.constant 0 : index
    %c0_1 = arith.constant 0 : index
    %c0_2 = arith.constant 0 : index
    %0 = tpu.strided_load %arg1[%c0, %c0_0, %c0_1, %c0_2] {strides = array<i32: 1, 1, 2, 1>} : memref<1x16x16x128xf32, #tpu.memory_space<vmem>>, vector<1x16x8x128xf32>
    %1 = vector.shape_cast %0 : vector<1x16x8x128xf32> to vector<16x8x128xf32>
    %c0_3 = arith.constant 0 : index
    %c0_4 = arith.constant 0 : index
    %c1 = arith.constant 1 : index
    %c0_5 = arith.constant 0 : index
    %2 = tpu.strided_load %arg1[%c0_3, %c0_4, %c1, %c0_5] {strides = array<i32: 1, 1, 2, 1>} : memref<1x16x16x128xf32, #tpu.memory_space<vmem>>, vector<1x16x8x128xf32>
    %3 = vector.shape_cast %2 : vector<1x16x8x128xf32> to vector<16x8x128xf32>
    %4 = arith.maximumf %1, %3 : vector<16x8x128xf32>
    %5 = vector.shape_cast %4 : vector<16x8x128xf32> to vector<8x2x8x128xf32>
    %cst = arith.constant dense<0xFF800000> : vector<8x8x128xf32>
    %6 = vector.multi_reduction <maximumf>, %5, %cst [1] : vector<8x2x8x128xf32> to vector<8x8x128xf32>
    %7 = arith.truncf %6 : vector<8x8x128xf32> to vector<8x8x128xbf16>
    %cst_6 = arith.constant 0.000000e+00 : bf16
    %8 = vector.broadcast %cst_6 : bf16 to vector<1x8x128xbf16>
    %9 = vector.extract_strided_slice %7 {offsets = [0, 0, 0], sizes = [7, 8, 128], strides = [1, 1, 1]} : vector<8x8x128xbf16> to vector<7x8x128xbf16>
    %10 = tpu.concatenate %8, %9 in 0 : vector<1x8x128xbf16>, vector<7x8x128xbf16> -> vector<8x8x128xbf16>
    %cst_7 = arith.constant 0.000000e+00 : bf16
    %11 = vector.broadcast %cst_7 : bf16 to vector<8x1x128xbf16>
    %12 = vector.extract_strided_slice %10 {offsets = [0, 0, 0], sizes = [8, 7, 128], strides = [1, 1, 1]} : vector<8x8x128xbf16> to vector<8x7x128xbf16>
    %13 = tpu.concatenate %11, %12 in 1 : vector<8x1x128xbf16>, vector<8x7x128xbf16> -> vector<8x8x128xbf16>
    %cst_8 = arith.constant 0.000000e+00 : bf16
    %14 = vector.broadcast %cst_8 : bf16 to vector<8x1x128xbf16>
    %15 = vector.extract_strided_slice %10 {offsets = [0, 1, 0], sizes = [8, 7, 128], strides = [1, 1, 1]} : vector<8x8x128xbf16> to vector<8x7x128xbf16>
    %16 = tpu.concatenate %15, %14 in 1 : vector<8x7x128xbf16>, vector<8x1x128xbf16> -> vector<8x8x128xbf16>
    %17 = tpu.concatenate %13, %10, %16 in 2 : vector<8x8x128xbf16>, vector<8x8x128xbf16>, vector<8x8x128xbf16> -> vector<8x8x384xbf16>
    %18 = vector.shape_cast %17 : vector<8x8x384xbf16> to vector<64x384xbf16>
    %c0_9 = arith.constant 0 : index
    %c0_10 = arith.constant 0 : index
    %19 = vector.load %arg2[%c0_9, %c0_10] : memref<1152x128xbf16, #tpu.memory_space<vmem>>, vector<384x128xbf16>
    %cst_11 = arith.constant dense<0.000000e+00> : vector<64x128xf32>
    %20 = tpu.matmul %18, %19, %cst_11 {dimension_numbers = #tpu.dot_dimension_numbers<[1], [0], [0], [1], [0, 0, 1, 1], [], []>} : vector<64x384xbf16>, vector<384x128xbf16>, vector<64x128xf32> -> vector<64x128xf32>
    %cst_12 = arith.constant 0.000000e+00 : bf16
    %21 = vector.broadcast %cst_12 : bf16 to vector<8x1x128xbf16>
    %22 = vector.extract_strided_slice %7 {offsets = [0, 0, 0], sizes = [8, 7, 128], strides = [1, 1, 1]} : vector<8x8x128xbf16> to vector<8x7x128xbf16>
    %23 = tpu.concatenate %21, %22 in 1 : vector<8x1x128xbf16>, vector<8x7x128xbf16> -> vector<8x8x128xbf16>
    %cst_13 = arith.constant 0.000000e+00 : bf16
    %24 = vector.broadcast %cst_13 : bf16 to vector<8x1x128xbf16>
    %25 = vector.extract_strided_slice %7 {offsets = [0, 1, 0], sizes = [8, 7, 128], strides = [1, 1, 1]} : vector<8x8x128xbf16> to vector<8x7x128xbf16>
    %26 = tpu.concatenate %25, %24 in 1 : vector<8x7x128xbf16>, vector<8x1x128xbf16> -> vector<8x8x128xbf16>
    %27 = tpu.concatenate %23, %7, %26 in 2 : vector<8x8x128xbf16>, vector<8x8x128xbf16>, vector<8x8x128xbf16> -> vector<8x8x384xbf16>
    %28 = vector.shape_cast %27 : vector<8x8x384xbf16> to vector<64x384xbf16>
    %c384 = arith.constant 384 : index
    %c0_14 = arith.constant 0 : index
    %29 = vector.load %arg2[%c384, %c0_14] : memref<1152x128xbf16, #tpu.memory_space<vmem>>, vector<384x128xbf16>
    %cst_15 = arith.constant dense<0.000000e+00> : vector<64x128xf32>
    %30 = tpu.matmul %28, %29, %cst_15 {dimension_numbers = #tpu.dot_dimension_numbers<[1], [0], [0], [1], [0, 0, 1, 1], [], []>} : vector<64x384xbf16>, vector<384x128xbf16>, vector<64x128xf32> -> vector<64x128xf32>
    %31 = arith.addf %20, %30 : vector<64x128xf32>
    %cst_16 = arith.constant 0.000000e+00 : bf16
    %32 = vector.broadcast %cst_16 : bf16 to vector<1x8x128xbf16>
    %33 = vector.extract_strided_slice %7 {offsets = [1, 0, 0], sizes = [7, 8, 128], strides = [1, 1, 1]} : vector<8x8x128xbf16> to vector<7x8x128xbf16>
    %34 = tpu.concatenate %33, %32 in 0 : vector<7x8x128xbf16>, vector<1x8x128xbf16> -> vector<8x8x128xbf16>
    %cst_17 = arith.constant 0.000000e+00 : bf16
    %35 = vector.broadcast %cst_17 : bf16 to vector<8x1x128xbf16>
    %36 = vector.extract_strided_slice %34 {offsets = [0, 0, 0], sizes = [8, 7, 128], strides = [1, 1, 1]} : vector<8x8x128xbf16> to vector<8x7x128xbf16>
    %37 = tpu.concatenate %35, %36 in 1 : vector<8x1x128xbf16>, vector<8x7x128xbf16> -> vector<8x8x128xbf16>
    %cst_18 = arith.constant 0.000000e+00 : bf16
    %38 = vector.broadcast %cst_18 : bf16 to vector<8x1x128xbf16>
    %39 = vector.extract_strided_slice %34 {offsets = [0, 1, 0], sizes = [8, 7, 128], strides = [1, 1, 1]} : vector<8x8x128xbf16> to vector<8x7x128xbf16>
    %40 = tpu.concatenate %39, %38 in 1 : vector<8x7x128xbf16>, vector<8x1x128xbf16> -> vector<8x8x128xbf16>
    %41 = tpu.concatenate %37, %34, %40 in 2 : vector<8x8x128xbf16>, vector<8x8x128xbf16>, vector<8x8x128xbf16> -> vector<8x8x384xbf16>
    %42 = vector.shape_cast %41 : vector<8x8x384xbf16> to vector<64x384xbf16>
    %c768 = arith.constant 768 : index
    %c0_19 = arith.constant 0 : index
    %43 = vector.load %arg2[%c768, %c0_19] : memref<1152x128xbf16, #tpu.memory_space<vmem>>, vector<384x128xbf16>
    %cst_20 = arith.constant dense<0.000000e+00> : vector<64x128xf32>
    %44 = tpu.matmul %42, %43, %cst_20 {dimension_numbers = #tpu.dot_dimension_numbers<[1], [0], [0], [1], [0, 0, 1, 1], [], []>} : vector<64x384xbf16>, vector<384x128xbf16>, vector<64x128xf32> -> vector<64x128xf32>
    %45 = arith.addf %31, %44 : vector<64x128xf32>
    %46 = vector.shape_cast %45 : vector<64x128xf32> to vector<8x8x128xf32>
    %47 = arith.truncf %46 : vector<8x8x128xf32> to vector<8x8x128xbf16>
    %c0_21 = arith.constant 0 : index
    %c0_22 = arith.constant 0 : index
    %c0_23 = arith.constant 0 : index
    %c0_24 = arith.constant 0 : index
    %48 = vector.load %arg3[%c0_21, %c0_22, %c0_23, %c0_24] : memref<1x8x8x128xbf16, #tpu.memory_space<vmem>>, vector<1x8x8x128xbf16>
    %49 = vector.shape_cast %48 : vector<1x8x8x128xbf16> to vector<8x8x128xbf16>
    %50 = vector.shape_cast %47 : vector<8x8x128xbf16> to vector<1x8x8x128xbf16>
    tpu.vector_store %arg3[%c0_21, %c0_22, %c0_23, %c0_24], %50 {strides = array<i32>} : memref<1x8x8x128xbf16, #tpu.memory_space<vmem>>, vector<1x8x8x128xbf16>,
    %cst_25 = arith.constant dense<0.000000e+00> : vector<128xf32>
    %51 = vector.multi_reduction <add>, %45, %cst_25 [0] : vector<64x128xf32> to vector<128xf32>
    %52 = vector.shape_cast %51 : vector<128xf32> to vector<1x128xf32>
    %53 = arith.mulf %45, %45 : vector<64x128xf32>
    %cst_26 = arith.constant dense<0.000000e+00> : vector<128xf32>
    %54 = vector.multi_reduction <add>, %53, %cst_26 [0] : vector<64x128xf32> to vector<128xf32>
    %55 = vector.shape_cast %54 : vector<128xf32> to vector<1x128xf32>
    %cst_27 = arith.constant 0.000000e+00 : f32
    %56 = vector.broadcast %cst_27 : f32 to vector<6x128xf32>
    %57 = tpu.concatenate %52, %55, %56 in 0 : vector<1x128xf32>, vector<1x128xf32>, vector<6x128xf32> -> vector<8x128xf32>
    %c0_28 = arith.constant 0 : index
    %c0_29 = arith.constant 0 : index
    %c0_30 = arith.constant 0 : index
    %58 = vector.load %arg4[%c0_28, %c0_29, %c0_30] : memref<1x8x128xf32, #tpu.memory_space<vmem>>, vector<1x8x128xf32>
    %59 = vector.shape_cast %58 : vector<1x8x128xf32> to vector<8x128xf32>
    %60 = vector.shape_cast %57 : vector<8x128xf32> to vector<1x8x128xf32>
    tpu.vector_store %arg4[%c0_28, %c0_29, %c0_30], %60 {strides = array<i32>} : memref<1x8x128xf32, #tpu.memory_space<vmem>>, vector<1x8x128xf32>,
    return
  }
  func.func @transform_0(%arg0: i32) -> (i32, i32, i32, i32) {
    %c0_i32 = arith.constant 0 : i32
    %c0_i32_0 = arith.constant 0 : i32
    %c0_i32_1 = arith.constant 0 : i32
    %c0_i32_2 = arith.constant 0 : i32
    return %arg0, %c0_i32, %c0_i32_0, %c0_i32_1 : i32, i32, i32, i32
  }
  func.func @transform_1(%arg0: i32) -> (i32, i32) {
    %c0_i32 = arith.constant 0 : i32
    %c0_i32_0 = arith.constant 0 : i32
    %c0_i32_1 = arith.constant 0 : i32
    return %c0_i32, %c0_i32_0 : i32, i32
  }
  func.func @transform_2(%arg0: i32) -> (i32, i32, i32, i32) {
    %c0_i32 = arith.constant 0 : i32
    %c0_i32_0 = arith.constant 0 : i32
    %c0_i32_1 = arith.constant 0 : i32
    %c0_i32_2 = arith.constant 0 : i32
    return %arg0, %c0_i32, %c0_i32_0, %c0_i32_1 : i32, i32, i32, i32
  }
  func.func @transform_3(%arg0: i32) -> (i32, i32, i32) {
    %c0_i32 = arith.constant 0 : i32
    %c0_i32_0 = arith.constant 0 : i32
    %c0_i32_1 = arith.constant 0 : i32
    return %arg0, %c0_i32, %c0_i32_0 : i32, i32, i32
  }
}

module attributes {stable_mosaic.version = 11 : i64} {
  func.func @_bn1_conv2_kernel(%arg0: i32, %arg1: memref<1x8x8x128xbf16, #tpu.memory_space<vmem>>, %arg2: memref<1x128xf32, #tpu.memory_space<vmem>>, %arg3: memref<1x128xf32, #tpu.memory_space<vmem>>, %arg4: memref<1152x128xbf16, #tpu.memory_space<vmem>>, %arg5: memref<1x8x8x128xbf16, #tpu.memory_space<vmem>>, %arg6: memref<1x8x128xf32, #tpu.memory_space<vmem>>) attributes {dimension_semantics = [#tpu.dimension_semantics<parallel>], iteration_bounds = array<i64: 2>, scalar_prefetch = 0 : i64, scratch_operands = 0 : i64, tpu.core_type = #tpu.core_type<tc>, window_params = [{transform_indices = @transform_0, window_bounds = array<i64: 1, 8, 8, 128>}, {pipeline_mode = #tpu.pipeline_mode<synchronous>, transform_indices = @transform_1, window_bounds = array<i64: 1, 128>}, {pipeline_mode = #tpu.pipeline_mode<synchronous>, transform_indices = @transform_2, window_bounds = array<i64: 1, 128>}, {pipeline_mode = #tpu.pipeline_mode<synchronous>, transform_indices = @transform_3, window_bounds = array<i64: 1152, 128>}, {transform_indices = @transform_4, window_bounds = array<i64: 1, 8, 8, 128>}, {transform_indices = @transform_5, window_bounds = array<i64: 1, 8, 128>}]} {
    %c0 = arith.constant 0 : index
    %c0_0 = arith.constant 0 : index
    %c0_1 = arith.constant 0 : index
    %c0_2 = arith.constant 0 : index
    %0 = vector.load %arg1[%c0, %c0_0, %c0_1, %c0_2] : memref<1x8x8x128xbf16, #tpu.memory_space<vmem>>, vector<1x8x8x128xbf16>
    %1 = vector.shape_cast %0 : vector<1x8x8x128xbf16> to vector<8x8x128xbf16>
    %2 = arith.extf %1 : vector<8x8x128xbf16> to vector<8x8x128xf32>
    %c0_3 = arith.constant 0 : index
    %c0_4 = arith.constant 0 : index
    %3 = vector.load %arg2[%c0_3, %c0_4] : memref<1x128xf32, #tpu.memory_space<vmem>>, vector<1x128xf32>
    %4 = vector.shape_cast %3 : vector<1x128xf32> to vector<1x1x128xf32>
    %5 = vector.broadcast %4 : vector<1x1x128xf32> to vector<8x8x128xf32>
    %6 = arith.mulf %2, %5 : vector<8x8x128xf32>
    %c0_5 = arith.constant 0 : index
    %c0_6 = arith.constant 0 : index
    %7 = vector.load %arg3[%c0_5, %c0_6] : memref<1x128xf32, #tpu.memory_space<vmem>>, vector<1x128xf32>
    %8 = vector.shape_cast %7 : vector<1x128xf32> to vector<1x1x128xf32>
    %9 = vector.broadcast %8 : vector<1x1x128xf32> to vector<8x8x128xf32>
    %10 = arith.addf %6, %9 : vector<8x8x128xf32>
    %cst = arith.constant 0.000000e+00 : f32
    %11 = vector.broadcast %cst : f32 to vector<8x8x128xf32>
    %12 = arith.maximumf %10, %11 : vector<8x8x128xf32>
    %13 = arith.truncf %12 : vector<8x8x128xf32> to vector<8x8x128xbf16>
    %cst_7 = arith.constant 0.000000e+00 : bf16
    %14 = vector.broadcast %cst_7 : bf16 to vector<1x8x128xbf16>
    %15 = vector.extract_strided_slice %13 {offsets = [0, 0, 0], sizes = [7, 8, 128], strides = [1, 1, 1]} : vector<8x8x128xbf16> to vector<7x8x128xbf16>
    %16 = tpu.concatenate %14, %15 in 0 : vector<1x8x128xbf16>, vector<7x8x128xbf16> -> vector<8x8x128xbf16>
    %cst_8 = arith.constant 0.000000e+00 : bf16
    %17 = vector.broadcast %cst_8 : bf16 to vector<8x1x128xbf16>
    %18 = vector.extract_strided_slice %16 {offsets = [0, 0, 0], sizes = [8, 7, 128], strides = [1, 1, 1]} : vector<8x8x128xbf16> to vector<8x7x128xbf16>
    %19 = tpu.concatenate %17, %18 in 1 : vector<8x1x128xbf16>, vector<8x7x128xbf16> -> vector<8x8x128xbf16>
    %cst_9 = arith.constant 0.000000e+00 : bf16
    %20 = vector.broadcast %cst_9 : bf16 to vector<8x1x128xbf16>
    %21 = vector.extract_strided_slice %16 {offsets = [0, 1, 0], sizes = [8, 7, 128], strides = [1, 1, 1]} : vector<8x8x128xbf16> to vector<8x7x128xbf16>
    %22 = tpu.concatenate %21, %20 in 1 : vector<8x7x128xbf16>, vector<8x1x128xbf16> -> vector<8x8x128xbf16>
    %23 = tpu.concatenate %19, %16, %22 in 2 : vector<8x8x128xbf16>, vector<8x8x128xbf16>, vector<8x8x128xbf16> -> vector<8x8x384xbf16>
    %24 = vector.shape_cast %23 : vector<8x8x384xbf16> to vector<64x384xbf16>
    %c0_10 = arith.constant 0 : index
    %c0_11 = arith.constant 0 : index
    %25 = vector.load %arg4[%c0_10, %c0_11] : memref<1152x128xbf16, #tpu.memory_space<vmem>>, vector<384x128xbf16>
    %cst_12 = arith.constant dense<0.000000e+00> : vector<64x128xf32>
    %26 = tpu.matmul %24, %25, %cst_12 {dimension_numbers = #tpu.dot_dimension_numbers<[1], [0], [0], [1], [0, 0, 1, 1], [], []>} : vector<64x384xbf16>, vector<384x128xbf16>, vector<64x128xf32> -> vector<64x128xf32>
    %cst_13 = arith.constant 0.000000e+00 : bf16
    %27 = vector.broadcast %cst_13 : bf16 to vector<8x1x128xbf16>
    %28 = vector.extract_strided_slice %13 {offsets = [0, 0, 0], sizes = [8, 7, 128], strides = [1, 1, 1]} : vector<8x8x128xbf16> to vector<8x7x128xbf16>
    %29 = tpu.concatenate %27, %28 in 1 : vector<8x1x128xbf16>, vector<8x7x128xbf16> -> vector<8x8x128xbf16>
    %cst_14 = arith.constant 0.000000e+00 : bf16
    %30 = vector.broadcast %cst_14 : bf16 to vector<8x1x128xbf16>
    %31 = vector.extract_strided_slice %13 {offsets = [0, 1, 0], sizes = [8, 7, 128], strides = [1, 1, 1]} : vector<8x8x128xbf16> to vector<8x7x128xbf16>
    %32 = tpu.concatenate %31, %30 in 1 : vector<8x7x128xbf16>, vector<8x1x128xbf16> -> vector<8x8x128xbf16>
    %33 = tpu.concatenate %29, %13, %32 in 2 : vector<8x8x128xbf16>, vector<8x8x128xbf16>, vector<8x8x128xbf16> -> vector<8x8x384xbf16>
    %34 = vector.shape_cast %33 : vector<8x8x384xbf16> to vector<64x384xbf16>
    %c384 = arith.constant 384 : index
    %c0_15 = arith.constant 0 : index
    %35 = vector.load %arg4[%c384, %c0_15] : memref<1152x128xbf16, #tpu.memory_space<vmem>>, vector<384x128xbf16>
    %cst_16 = arith.constant dense<0.000000e+00> : vector<64x128xf32>
    %36 = tpu.matmul %34, %35, %cst_16 {dimension_numbers = #tpu.dot_dimension_numbers<[1], [0], [0], [1], [0, 0, 1, 1], [], []>} : vector<64x384xbf16>, vector<384x128xbf16>, vector<64x128xf32> -> vector<64x128xf32>
    %37 = arith.addf %26, %36 : vector<64x128xf32>
    %cst_17 = arith.constant 0.000000e+00 : bf16
    %38 = vector.broadcast %cst_17 : bf16 to vector<1x8x128xbf16>
    %39 = vector.extract_strided_slice %13 {offsets = [1, 0, 0], sizes = [7, 8, 128], strides = [1, 1, 1]} : vector<8x8x128xbf16> to vector<7x8x128xbf16>
    %40 = tpu.concatenate %39, %38 in 0 : vector<7x8x128xbf16>, vector<1x8x128xbf16> -> vector<8x8x128xbf16>
    %cst_18 = arith.constant 0.000000e+00 : bf16
    %41 = vector.broadcast %cst_18 : bf16 to vector<8x1x128xbf16>
    %42 = vector.extract_strided_slice %40 {offsets = [0, 0, 0], sizes = [8, 7, 128], strides = [1, 1, 1]} : vector<8x8x128xbf16> to vector<8x7x128xbf16>
    %43 = tpu.concatenate %41, %42 in 1 : vector<8x1x128xbf16>, vector<8x7x128xbf16> -> vector<8x8x128xbf16>
    %cst_19 = arith.constant 0.000000e+00 : bf16
    %44 = vector.broadcast %cst_19 : bf16 to vector<8x1x128xbf16>
    %45 = vector.extract_strided_slice %40 {offsets = [0, 1, 0], sizes = [8, 7, 128], strides = [1, 1, 1]} : vector<8x8x128xbf16> to vector<8x7x128xbf16>
    %46 = tpu.concatenate %45, %44 in 1 : vector<8x7x128xbf16>, vector<8x1x128xbf16> -> vector<8x8x128xbf16>
    %47 = tpu.concatenate %43, %40, %46 in 2 : vector<8x8x128xbf16>, vector<8x8x128xbf16>, vector<8x8x128xbf16> -> vector<8x8x384xbf16>
    %48 = vector.shape_cast %47 : vector<8x8x384xbf16> to vector<64x384xbf16>
    %c768 = arith.constant 768 : index
    %c0_20 = arith.constant 0 : index
    %49 = vector.load %arg4[%c768, %c0_20] : memref<1152x128xbf16, #tpu.memory_space<vmem>>, vector<384x128xbf16>
    %cst_21 = arith.constant dense<0.000000e+00> : vector<64x128xf32>
    %50 = tpu.matmul %48, %49, %cst_21 {dimension_numbers = #tpu.dot_dimension_numbers<[1], [0], [0], [1], [0, 0, 1, 1], [], []>} : vector<64x384xbf16>, vector<384x128xbf16>, vector<64x128xf32> -> vector<64x128xf32>
    %51 = arith.addf %37, %50 : vector<64x128xf32>
    %52 = vector.shape_cast %51 : vector<64x128xf32> to vector<8x8x128xf32>
    %53 = arith.truncf %52 : vector<8x8x128xf32> to vector<8x8x128xbf16>
    %c0_22 = arith.constant 0 : index
    %c0_23 = arith.constant 0 : index
    %c0_24 = arith.constant 0 : index
    %c0_25 = arith.constant 0 : index
    %54 = vector.load %arg5[%c0_22, %c0_23, %c0_24, %c0_25] : memref<1x8x8x128xbf16, #tpu.memory_space<vmem>>, vector<1x8x8x128xbf16>
    %55 = vector.shape_cast %54 : vector<1x8x8x128xbf16> to vector<8x8x128xbf16>
    %56 = vector.shape_cast %53 : vector<8x8x128xbf16> to vector<1x8x8x128xbf16>
    tpu.vector_store %arg5[%c0_22, %c0_23, %c0_24, %c0_25], %56 {strides = array<i32>} : memref<1x8x8x128xbf16, #tpu.memory_space<vmem>>, vector<1x8x8x128xbf16>,
    %cst_26 = arith.constant dense<0.000000e+00> : vector<128xf32>
    %57 = vector.multi_reduction <add>, %51, %cst_26 [0] : vector<64x128xf32> to vector<128xf32>
    %58 = vector.shape_cast %57 : vector<128xf32> to vector<1x128xf32>
    %59 = arith.mulf %51, %51 : vector<64x128xf32>
    %cst_27 = arith.constant dense<0.000000e+00> : vector<128xf32>
    %60 = vector.multi_reduction <add>, %59, %cst_27 [0] : vector<64x128xf32> to vector<128xf32>
    %61 = vector.shape_cast %60 : vector<128xf32> to vector<1x128xf32>
    %cst_28 = arith.constant 0.000000e+00 : f32
    %62 = vector.broadcast %cst_28 : f32 to vector<6x128xf32>
    %63 = tpu.concatenate %58, %61, %62 in 0 : vector<1x128xf32>, vector<1x128xf32>, vector<6x128xf32> -> vector<8x128xf32>
    %c0_29 = arith.constant 0 : index
    %c0_30 = arith.constant 0 : index
    %c0_31 = arith.constant 0 : index
    %64 = vector.load %arg6[%c0_29, %c0_30, %c0_31] : memref<1x8x128xf32, #tpu.memory_space<vmem>>, vector<1x8x128xf32>
    %65 = vector.shape_cast %64 : vector<1x8x128xf32> to vector<8x128xf32>
    %66 = vector.shape_cast %63 : vector<8x128xf32> to vector<1x8x128xf32>
    tpu.vector_store %arg6[%c0_29, %c0_30, %c0_31], %66 {strides = array<i32>} : memref<1x8x128xf32, #tpu.memory_space<vmem>>, vector<1x8x128xf32>,
    return
  }
  func.func @transform_0(%arg0: i32) -> (i32, i32, i32, i32) {
    %c0_i32 = arith.constant 0 : i32
    %c0_i32_0 = arith.constant 0 : i32
    %c0_i32_1 = arith.constant 0 : i32
    %c0_i32_2 = arith.constant 0 : i32
    return %arg0, %c0_i32, %c0_i32_0, %c0_i32_1 : i32, i32, i32, i32
  }
  func.func @transform_1(%arg0: i32) -> (i32, i32) {
    %c0_i32 = arith.constant 0 : i32
    %c0_i32_0 = arith.constant 0 : i32
    %c0_i32_1 = arith.constant 0 : i32
    return %c0_i32, %c0_i32_0 : i32, i32
  }
  func.func @transform_2(%arg0: i32) -> (i32, i32) {
    %c0_i32 = arith.constant 0 : i32
    %c0_i32_0 = arith.constant 0 : i32
    %c0_i32_1 = arith.constant 0 : i32
    return %c0_i32, %c0_i32_0 : i32, i32
  }
  func.func @transform_3(%arg0: i32) -> (i32, i32) {
    %c0_i32 = arith.constant 0 : i32
    %c0_i32_0 = arith.constant 0 : i32
    %c0_i32_1 = arith.constant 0 : i32
    return %c0_i32, %c0_i32_0 : i32, i32
  }
  func.func @transform_4(%arg0: i32) -> (i32, i32, i32, i32) {
    %c0_i32 = arith.constant 0 : i32
    %c0_i32_0 = arith.constant 0 : i32
    %c0_i32_1 = arith.constant 0 : i32
    %c0_i32_2 = arith.constant 0 : i32
    return %arg0, %c0_i32, %c0_i32_0, %c0_i32_1 : i32, i32, i32, i32
  }
  func.func @transform_5(%arg0: i32) -> (i32, i32, i32) {
    %c0_i32 = arith.constant 0 : i32
    %c0_i32_0 = arith.constant 0 : i32
    %c0_i32_1 = arith.constant 0 : i32
    return %arg0, %c0_i32, %c0_i32_0 : i32, i32, i32
  }
}

</mosaic_0001>

<llo_original>
// kernel: down_forward.2
$region0: #{down_forward.2}
  #allocation0 [shape = 'u32[]', space=smem, size = 0x4, offset = 0x4, fixed_abs, tag = 'smem constant byte address 0x4 - core index']
  #allocation1 [shape = 'u32[144,128]{1,0:T(1,128)}', space=vmem, size = 0x12000, scoped, tag = 'internal scratch']
  %s0 = inlined_call_operand.vmem [shape: f32[2,16,16,128], index: 0, kind: input, shape index: {}]
  %s1 = inlined_call_operand.vmem [shape: bf16[1152,128], index: 1, kind: input, shape index: {}]
  %s2 = inlined_call_operand.vmem [shape: bf16[2,8,8,128], index: 2, kind: output, shape index: {0}]
  %s3 = inlined_call_operand.vmem [shape: f32[2,8,128], index: 3, kind: output, shape index: {1}]
  %4 = xla_tuple %s2, %s3
  %s5 = sld [smem:[#allocation0]]
  $region49: #{down_forward.2} parent=0
    _
  %s7 = ssub.s32 1, %s5
  %s8 = scalar_select 0, %s7, %s5
  loop: start=0, step=1, limit=4
  $region2: #{down_forward.2} parent=0 // loop_pre_header
    _
  $region3: #{down_forward.2} parent=0 // loop_header
    %s10 = sphi 0, %s14
    %p11 = scmp.ge.s32.totalorder %s10, 4
    %s20 = sphi 0, %s22
    %s23 = sphi 0, %s20
    %s24 = sphi 0, %s23
    %s40 = sphi 0, %s24
    %s44 = sphi 0, %s44
    %s46 = sphi 0, %s44
    %s47 = sphi 0, %s46
    %s61 = sphi 0, %s47
    %s67 = sphi 0, %s69
    %s70 = sphi 0, %s67
    %s71 = sphi 0, %s70
    %s87 = sphi 0, %s71
    %s93 = sphi 0, %s95
    %s96 = sphi 0, %s93
    %s97 = sphi 0, %s96
    %s113 = sphi 0, %s97
  $region4: #{down_forward.2} parent=0 // loop_header_branch
    %13 = sbr.rel (%p11) target = $region8
  $region5: #{down_forward.2} parent=0 // loop_body
    %s15 = ssub.s32 %s10, 1
    %s16 = ssub.s32 %s10, 2
    %s17 = sadd.s32 %s10, 1
    %s18 = ssub.s32 %s10, %s17
    %p19 = scmp.eq.s32.totalorder %s18, 0
    %s21 = sadd.s32 %s20, 1
    %s22 = scalar_select %p19, %s20, %s21
    %p25 = pneg %p19
    %p26 = scmp.eq.s32.totalorder %s10, 1
    %p27 = por %p25, %p26
    %p28 = scmp.ne.s32.totalorder %s20, %s23
    %p29 = scmp.eq.s32.totalorder %s10, 0
    %p30 = por %p28, %p29
    %p31 = scmp.ne.s32.totalorder %s20, %s23
    %p32 = scmp.eq.s32.totalorder %s15, 1
    %p33 = por %p31, %p32
    %p34 = scmp.ne.s32.totalorder %s23, %s24
    %p35 = scmp.eq.s32.totalorder %s15, 0
    %p36 = por %p34, %p35
    %p37 = scmp.ne.s32.totalorder %s23, %s24
    %p38 = scmp.eq.s32.totalorder %s16, 1
    %p39 = por %p37, %p38
    %p41 = scmp.ne.s32.totalorder %s24, %s40
    %p42 = scmp.eq.s32.totalorder %s16, 0
    %p43 = por %p41, %p42
    %s45 = sadd.s32 %s44, 1
    %p48 = scmp.eq.s32.totalorder %s10, 1
    %p49 = scmp.ne.s32.totalorder %s44, %s46
    %p50 = scmp.eq.s32.totalorder %s10, 0
    %p51 = por %p49, %p50
    %p52 = scmp.ne.s32.totalorder %s44, %s46
    %p53 = scmp.eq.s32.totalorder %s15, 1
    %p54 = por %p52, %p53
    %p55 = scmp.ne.s32.totalorder %s46, %s47
    %p56 = scmp.eq.s32.totalorder %s15, 0
    %p57 = por %p55, %p56
    %p58 = scmp.ne.s32.totalorder %s46, %s47
    %p59 = scmp.eq.s32.totalorder %s16, 1
    %p60 = por %p58, %p59
    %p62 = scmp.ne.s32.totalorder %s47, %s61
    %p63 = scmp.eq.s32.totalorder %s16, 0
    %p64 = por %p62, %p63
    %s65 = ssub.s32 %s10, %s17
    %p66 = scmp.eq.s32.totalorder %s65, 0
    %s68 = sadd.s32 %s67, 1
    %s69 = scalar_select %p66, %s67, %s68
    %p72 = pneg %p66
    %p73 = scmp.eq.s32.totalorder %s10, 1
    %p74 = por %p72, %p73
    %p75 = scmp.ne.s32.totalorder %s67, %s70
    %p76 = scmp.eq.s32.totalorder %s10, 0
    %p77 = por %p75, %p76
    %p78 = scmp.ne.s32.totalorder %s67, %s70
    %p79 = scmp.eq.s32.totalorder %s15, 1
    %p80 = por %p78, %p79
    %p81 = scmp.ne.s32.totalorder %s70, %s71
    %p82 = scmp.eq.s32.totalorder %s15, 0
    %p83 = por %p81, %p82
    %p84 = scmp.ne.s32.totalorder %s70, %s71
    %p85 = scmp.eq.s32.totalorder %s16, 1
    %p86 = por %p84, %p85
    %p88 = scmp.ne.s32.totalorder %s71, %s87
    %p89 = scmp.eq.s32.totalorder %s16, 0
    %p90 = por %p88, %p89
    %s91 = ssub.s32 %s10, %s17
    %p92 = scmp.eq.s32.totalorder %s91, 0
    %s94 = sadd.s32 %s93, 1
    %s95 = scalar_select %p92, %s93, %s94
    %p98 = pneg %p92
    %p99 = scmp.eq.s32.totalorder %s10, 1
    %p100 = por %p98, %p99
    %p101 = scmp.ne.s32.totalorder %s93, %s96
    %p102 = scmp.eq.s32.totalorder %s10, 0
    %p103 = por %p101, %p102
    %p104 = scmp.ne.s32.totalorder %s93, %s96
    %p105 = scmp.eq.s32.totalorder %s15, 1
    %p106 = por %p104, %p105
    %p107 = scmp.ne.s32.totalorder %s96, %s97
    %p108 = scmp.eq.s32.totalorder %s15, 0
    %p109 = por %p107, %p108
    %p110 = scmp.ne.s32.totalorder %s96, %s97
    %p111 = scmp.eq.s32.totalorder %s16, 1
    %p112 = por %p110, %p111
    %p114 = scmp.ne.s32.totalorder %s97, %s113
    %p115 = scmp.eq.s32.totalorder %s16, 0
    %p116 = por %p114, %p115
    %p117 = scmp.le.s32.totalorder 1, %s10
    %p118 = scmp.lt.s32.totalorder %s10, 3
    %p119 = pnand %p117, %p118
    %p120 = pneg %p119
    // Predicated region
    $region9: #{down_forward.2} parent=5 // pred_check
      _
    $region10: #{down_forward.2} parent=5 // pred_check_branch
      %122 = sbr.rel (%p119) target = $region12
    $region11: #{down_forward.2} parent=5 // pred_region
      %s123 = ssub.s32 %s10, 1
      // Predicated region
      $region13: #{down_forward.2} parent=11 // pred_check
        %p124 = pneg %p57
      $region14: #{down_forward.2} parent=11 // pred_check_branch
        %126 = sbr.rel (%p124) target = $region16
      $region15: #{down_forward.2} parent=11 // pred_region
        _
      $region16: #{down_forward.2} parent=11 // pred_fallthru
        _
    $region12: #{down_forward.2} parent=5 // pred_fallthru
      _
    %p127 = scmp.lt.s32.totalorder %s10, 2
    // Predicated region
    $region17: #{down_forward.2} parent=5 // pred_check
      %p128 = pneg %p127
    $region18: #{down_forward.2} parent=5 // pred_check_branch
      %130 = sbr.rel (%p128) target = $region20
    $region19: #{down_forward.2} parent=5 // pred_region
      // Predicated region
      $region21: #{down_forward.2} parent=19 // pred_check
        %p131 = pneg %p30
      $region22: #{down_forward.2} parent=19 // pred_check_branch
        %133 = sbr.rel (%p131) target = $region24
      $region23: #{down_forward.2} parent=19 // pred_region
        %p134 = scmp.lt.s32.totalorder %s10, 1
        %s135 = scalar_select %p134, %s10, 1
        %s136 = smul.addr %s135, 32
        %s137 = smul.addr %s136, 8
        %s138 = scalar_lea.vmem %s0, %s137
      $region24: #{down_forward.2} parent=19 // pred_fallthru
        _
    $region20: #{down_forward.2} parent=5 // pred_fallthru
      _
    %p139 = scmp.le.s32.totalorder 1, %s10
    %p140 = scmp.lt.s32.totalorder %s10, 3
    %p141 = pnand %p139, %p140
    %p142 = pneg %p141
    // Predicated region
    $region25: #{down_forward.2} parent=5 // pred_check
      _
    $region26: #{down_forward.2} parent=5 // pred_check_branch
      %144 = sbr.rel (%p141) target = $region28
    $region27: #{down_forward.2} parent=5 // pred_region
      %s145 = ssub.s32 %s10, 1
      %p146 = scmp.lt.s32.totalorder %s15, 1
      %s147 = scalar_select %p146, %s15, 1
      %s148 = smul.addr %s147, 32
      %s149 = smul.addr %s148, 8
      %s150 = scalar_lea.vmem %s0, %s149
      %p151 = pneg %p36
      %p152 = pneg %p33
      %p153 = pneg %p57
      %p154 = pneg %p54
      %p155 = pneg %p83
      %p156 = pneg %p80
      %p157 = scmp.lt.s32.totalorder %s15, 1
      %s158 = scalar_select %p157, %s15, 1
      %s159 = smul.addr %s158, 8
      %s160 = smul.addr %s159, 4
      %s161 = scalar_lea.vmem %s2, %s160
      %p162 = pneg %p109
      %p163 = pneg %p106
      %p164 = scmp.lt.s32.totalorder %s15, 1
      %s165 = scalar_select %p164, %s15, 1
      %s166 = smul.addr %s165, 8
      %s167 = scalar_lea.vmem %s3, %s166
      %p168 = scmp.lt.s32.totalorder %s15, 1
      %s169 = scalar_select %p168, %s15, 1
      %s170 = smul.addr %s169, 32
      %s171 = smul.addr %s170, 8
      %s172 = scalar_lea.vmem %s0, %s171
      %p173 = scmp.lt.s32.totalorder %s15, 1
      %s174 = scalar_select %p173, %s15, 1
      %s175 = smul.addr %s174, 8
      %s176 = smul.addr %s175, 4
      %s177 = scalar_lea.vmem %s2, %s176
      %p178 = scmp.lt.s32.totalorder %s15, 1
      %s179 = scalar_select %p178, %s15, 1
      %s180 = smul.addr %s179, 8
      %s181 = scalar_lea.vmem %s3, %s180
      %v183 = vld [vmem:[%s172] ss:$2 sm:$0xff]
      %s184 = scalar_lea.vmem %s172, 16
      %v185 = vld [vmem:[%s184] ss:$2 sm:$0xff]
      %s186 = scalar_lea.vmem %s172, 32
      %v187 = vld [vmem:[%s186] ss:$2 sm:$0xff]
      %s188 = scalar_lea.vmem %s172, 48
      %v189 = vld [vmem:[%s188] ss:$2 sm:$0xff]
      %s190 = scalar_lea.vmem %s172, 64
      %v191 = vld [vmem:[%s190] ss:$2 sm:$0xff]
      %s192 = scalar_lea.vmem %s172, 80
      %v193 = vld [vmem:[%s192] ss:$2 sm:$0xff]
      %s194 = scalar_lea.vmem %s172, 96
      %v195 = vld [vmem:[%s194] ss:$2 sm:$0xff]
      %s196 = scalar_lea.vmem %s172, 112
      %v197 = vld [vmem:[%s196] ss:$2 sm:$0xff]
      %s198 = scalar_lea.vmem %s172, 128
      %v199 = vld [vmem:[%s198] ss:$2 sm:$0xff]
      %s200 = scalar_lea.vmem %s172, 144
      %v201 = vld [vmem:[%s200] ss:$2 sm:$0xff]
      %s202 = scalar_lea.vmem %s172, 160
      %v203 = vld [vmem:[%s202] ss:$2 sm:$0xff]
      %s204 = scalar_lea.vmem %s172, 176
      %v205 = vld [vmem:[%s204] ss:$2 sm:$0xff]
      %s206 = scalar_lea.vmem %s172, 192
      %v207 = vld [vmem:[%s206] ss:$2 sm:$0xff]
      %s208 = scalar_lea.vmem %s172, 208
      %v209 = vld [vmem:[%s208] ss:$2 sm:$0xff]
      %s210 = scalar_lea.vmem %s172, 224
      %v211 = vld [vmem:[%s210] ss:$2 sm:$0xff]
      %s212 = scalar_lea.vmem %s172, 240
      %v213 = vld [vmem:[%s212] ss:$2 sm:$0xff]
      %s214 = scalar_lea.vmem %s172, 1
      %v215 = vld [vmem:[%s214] ss:$2 sm:$0xff]
      %s216 = scalar_lea.vmem %s172, 17
      %v217 = vld [vmem:[%s216] ss:$2 sm:$0xff]
      %s218 = scalar_lea.vmem %s172, 33
      %v219 = vld [vmem:[%s218] ss:$2 sm:$0xff]
      %s220 = scalar_lea.vmem %s172, 49
      %v221 = vld [vmem:[%s220] ss:$2 sm:$0xff]
      %s222 = scalar_lea.vmem %s172, 65
      %v223 = vld [vmem:[%s222] ss:$2 sm:$0xff]
      %s224 = scalar_lea.vmem %s172, 81
      %v225 = vld [vmem:[%s224] ss:$2 sm:$0xff]
      %s226 = scalar_lea.vmem %s172, 97
      %v227 = vld [vmem:[%s226] ss:$2 sm:$0xff]
      %s228 = scalar_lea.vmem %s172, 113
      %v229 = vld [vmem:[%s228] ss:$2 sm:$0xff]
      %s230 = scalar_lea.vmem %s172, 129
      %v231 = vld [vmem:[%s230] ss:$2 sm:$0xff]
      %s232 = scalar_lea.vmem %s172, 145
      %v233 = vld [vmem:[%s232] ss:$2 sm:$0xff]
      %s234 = scalar_lea.vmem %s172, 161
      %v235 = vld [vmem:[%s234] ss:$2 sm:$0xff]
      %s236 = scalar_lea.vmem %s172, 177
      %v237 = vld [vmem:[%s236] ss:$2 sm:$0xff]
      %s238 = scalar_lea.vmem %s172, 193
      %v239 = vld [vmem:[%s238] ss:$2 sm:$0xff]
      %s240 = scalar_lea.vmem %s172, 209
      %v241 = vld [vmem:[%s240] ss:$2 sm:$0xff]
      %s242 = scalar_lea.vmem %s172, 225
      %v243 = vld [vmem:[%s242] ss:$2 sm:$0xff]
      %s244 = scalar_lea.vmem %s172, 241
      %v245 = vld [vmem:[%s244] ss:$2 sm:$0xff]
      %v246 = vmax.f32 %v183, %v215
      %v247 = vmax.f32 %v185, %v217
      %v248 = vmax.f32 %v187, %v219
      %v249 = vmax.f32 %v189, %v221
      %v250 = vmax.f32 %v191, %v223
      %v251 = vmax.f32 %v193, %v225
      %v252 = vmax.f32 %v195, %v227
      %v253 = vmax.f32 %v197, %v229
      %v254 = vmax.f32 %v199, %v231
      %v255 = vmax.f32 %v201, %v233
      %v256 = vmax.f32 %v203, %v235
      %v257 = vmax.f32 %v205, %v237
      %v258 = vmax.f32 %v207, %v239
      %v259 = vmax.f32 %v209, %v241
      %v260 = vmax.f32 %v211, %v243
      %v261 = vmax.f32 %v213, %v245
      %v262 = vmax.f32 %v246, %v247
      %v263 = vmax.f32 %v248, %v249
      %v264 = vmax.f32 %v250, %v251
      %v265 = vmax.f32 %v252, %v253
      %v266 = vmax.f32 %v254, %v255
      %v267 = vmax.f32 %v256, %v257
      %v268 = vmax.f32 %v258, %v259
      %v269 = vmax.f32 %v260, %v261
      %v270 = vpack.c.bf16 %v262, %v262
      %v271 = vpack.c.bf16 %v263, %v263
      %v272 = vpack.c.bf16 %v264, %v264
      %v273 = vpack.c.bf16 %v265, %v265
      %v274 = vpack.c.bf16 %v266, %v266
      %v275 = vpack.c.bf16 %v267, %v267
      %v276 = vpack.c.bf16 %v268, %v268
      %v277 = vpack.c.bf16 %v269, %v269
      %v279 = vshrl.u32 0, 16
      %v281 = vrot.slane %v279, 7
      %v282 = vshll.u32 0, 16
      %v284 = vor.u32 %v281, %v282
      %v286 = vshrl.u32 %v270, 16
      %v288 = vrot.slane %v286, 7
      %v289 = vshll.u32 %v270, 16
      %v291 = vor.u32 %v288, %v289
      %v293 = vshrl.u32 %v271, 16
      %v295 = vrot.slane %v293, 7
      %v296 = vshll.u32 %v271, 16
      %v298 = vor.u32 %v295, %v296
      %v300 = vshrl.u32 %v272, 16
      %v302 = vrot.slane %v300, 7
      %v303 = vshll.u32 %v272, 16
      %v305 = vor.u32 %v302, %v303
      %v307 = vshrl.u32 %v273, 16
      %v309 = vrot.slane %v307, 7
      %v310 = vshll.u32 %v273, 16
      %v312 = vor.u32 %v309, %v310
      %v314 = vshrl.u32 %v274, 16
      %v316 = vrot.slane %v314, 7
      %v317 = vshll.u32 %v274, 16
      %v319 = vor.u32 %v316, %v317
      %v321 = vshrl.u32 %v275, 16
      %v323 = vrot.slane %v321, 7
      %v324 = vshll.u32 %v275, 16
      %v326 = vor.u32 %v323, %v324
      %v328 = vshrl.u32 %v276, 16
      %v330 = vrot.slane %v328, 7
      %v331 = vshll.u32 %v276, 16
      %v333 = vor.u32 %v330, %v331
      %vm342 = vcmask 1040384
      %vm343 = vsmask.f32 256
      %vm344 = vmand %vm342, %vm343
      %v345 = vsel %vm344, 0, %v284
      %v346 = vsel %vm344, 0, %v291
      %v347 = vsel %vm344, 0, %v298
      %v348 = vsel %vm344, 0, %v305
      %v349 = vsel %vm344, 0, %v312
      %v350 = vsel %vm344, 0, %v319
      %v351 = vsel %vm344, 0, %v326
      %v352 = vsel %vm344, 0, %v333
      %v353 = vrot.slane %v282, 1
      %v354 = vor.u32 %v279, %v353
      %v355 = vrot.slane %v289, 1
      %v356 = vor.u32 %v286, %v355
      %v357 = vrot.slane %v296, 1
      %v358 = vor.u32 %v293, %v357
      %v359 = vrot.slane %v303, 1
      %v360 = vor.u32 %v300, %v359
      %v361 = vrot.slane %v310, 1
      %v362 = vor.u32 %v307, %v361
      %v363 = vrot.slane %v317, 1
      %v364 = vor.u32 %v314, %v363
      %v365 = vrot.slane %v324, 1
      %v366 = vor.u32 %v321, %v365
      %v367 = vrot.slane %v331, 1
      %v368 = vor.u32 %v328, %v367
      %vm377 = vcmask 1043456
      %vm378 = vsmask.f32 3328
      %vm379 = vmand %vm377, %vm378
      %v380 = vsel %vm379, %v354, 0
      %v381 = vsel %vm379, %v356, 0
      %v382 = vsel %vm379, %v358, 0
      %v383 = vsel %vm379, %v360, 0
      %v384 = vsel %vm379, %v362, 0
      %v385 = vsel %vm379, %v364, 0
      %v386 = vsel %vm379, %v366, 0
      %v387 = vsel %vm379, %v368, 0
      %v412 = vunpack.c.l.b16 %v345
      %v413 = vunpack.c.l.b16 0
      %v414 = vunpack.c.l.b16 %v380
      %v415 = vunpack.c.l.b16 %v346
      %v416 = vunpack.c.l.b16 %v270
      %v417 = vunpack.c.l.b16 %v381
      %v418 = vunpack.c.l.b16 %v347
      %v419 = vunpack.c.l.b16 %v271
      %v420 = vunpack.c.l.b16 %v382
      %v421 = vunpack.c.l.b16 %v348
      %v422 = vunpack.c.l.b16 %v272
      %v423 = vunpack.c.l.b16 %v383
      %v424 = vunpack.c.l.b16 %v349
      %v425 = vunpack.c.l.b16 %v273
      %v426 = vunpack.c.l.b16 %v384
      %v427 = vunpack.c.l.b16 %v350
      %v428 = vunpack.c.l.b16 %v274
      %v429 = vunpack.c.l.b16 %v385
      %v430 = vunpack.c.l.b16 %v351
      %v431 = vunpack.c.l.b16 %v275
      %v432 = vunpack.c.l.b16 %v386
      %v433 = vunpack.c.l.b16 %v352
      %v434 = vunpack.c.l.b16 %v276
      %v435 = vunpack.c.l.b16 %v387
      %v436 = vld [vmem:[%s1] sm:$0xf]
      %v437 = vld [vmem:[%s1 + $0x4] sm:$0xf]
      %v438 = vld [vmem:[%s1 + $0x8] sm:$0xf]
      %v439 = vld [vmem:[%s1 + $0xc] sm:$0xf]
      %v440 = vld [vmem:[%s1 + $0x10] sm:$0xf]
      %v441 = vld [vmem:[%s1 + $0x14] sm:$0xf]
      %v442 = vld [vmem:[%s1 + $0x18] sm:$0xf]
      %v443 = vld [vmem:[%s1 + $0x1c] sm:$0xf]
      %v444 = vld [vmem:[%s1 + $0x20] sm:$0xf]
      %v445 = vld [vmem:[%s1 + $0x24] sm:$0xf]
      %v446 = vld [vmem:[%s1 + $0x28] sm:$0xf]
      %v447 = vld [vmem:[%s1 + $0x2c] sm:$0xf]
      %v448 = vld [vmem:[%s1 + $0x30] sm:$0xf]
      %v449 = vld [vmem:[%s1 + $0x34] sm:$0xf]
      %v450 = vld [vmem:[%s1 + $0x38] sm:$0xf]
      %v451 = vld [vmem:[%s1 + $0x3c] sm:$0xf]
      %v452 = vld [vmem:[%s1 + $0x40] sm:$0xf]
      %v453 = vld [vmem:[%s1 + $0x44] sm:$0xf]
      %v454 = vld [vmem:[%s1 + $0x48] sm:$0xf]
      %v455 = vld [vmem:[%s1 + $0x4c] sm:$0xf]
      %v456 = vld [vmem:[%s1 + $0x50] sm:$0xf]
      %v457 = vld [vmem:[%s1 + $0x54] sm:$0xf]
      %v458 = vld [vmem:[%s1 + $0x58] sm:$0xf]
      %v459 = vld [vmem:[%s1 + $0x5c] sm:$0xf]
      %v460 = vld [vmem:[%s1 + $0x60] sm:$0xf]
      %v461 = vld [vmem:[%s1 + $0x64] sm:$0xf]
      %v462 = vld [vmem:[%s1 + $0x68] sm:$0xf]
      %v463 = vld [vmem:[%s1 + $0x6c] sm:$0xf]
      %v464 = vld [vmem:[%s1 + $0x70] sm:$0xf]
      %v465 = vld [vmem:[%s1 + $0x74] sm:$0xf]
      %v466 = vld [vmem:[%s1 + $0x78] sm:$0xf]
      %v467 = vld [vmem:[%s1 + $0x7c] sm:$0xf]
      %v468 = vld [vmem:[%s1 + $0x80] sm:$0xf]
      %v469 = vld [vmem:[%s1 + $0x84] sm:$0xf]
      %v470 = vld [vmem:[%s1 + $0x88] sm:$0xf]
      %v471 = vld [vmem:[%s1 + $0x8c] sm:$0xf]
      %v472 = vld [vmem:[%s1 + $0x90] sm:$0xf]
      %v473 = vld [vmem:[%s1 + $0x94] sm:$0xf]
      %v474 = vld [vmem:[%s1 + $0x98] sm:$0xf]
      %v475 = vld [vmem:[%s1 + $0x9c] sm:$0xf]
      %v476 = vld [vmem:[%s1 + $0xa0] sm:$0xf]
      %v477 = vld [vmem:[%s1 + $0xa4] sm:$0xf]
      %v478 = vld [vmem:[%s1 + $0xa8] sm:$0xf]
      %v479 = vld [vmem:[%s1 + $0xac] sm:$0xf]
      %v480 = vld [vmem:[%s1 + $0xb0] sm:$0xf]
      %v481 = vld [vmem:[%s1 + $0xb4] sm:$0xf]
      %v482 = vld [vmem:[%s1 + $0xb8] sm:$0xf]
      %v483 = vld [vmem:[%s1 + $0xbc] sm:$0xf]
      %v485 = vshrl.u32 %v277, 16
      %v487 = vrot.slane %v485, 7
      %v488 = vshll.u32 %v277, 16
      %v490 = vor.u32 %v487, %v488
      %v492 = vsel %vm344, 0, %v490
      %v493 = vrot.slane %v488, 1
      %v494 = vor.u32 %v485, %v493
      %v496 = vsel %vm379, %v494, 0
      %v500 = vunpack.c.l.b16 %v492
      %v501 = vunpack.c.l.b16 %v277
      %v502 = vunpack.c.l.b16 %v496
      %v503 = vld [vmem:[%s1 + $0xc0] sm:$0xf]
      %v504 = vld [vmem:[%s1 + $0xc4] sm:$0xf]
      %v505 = vld [vmem:[%s1 + $0xc8] sm:$0xf]
      %v506 = vld [vmem:[%s1 + $0xcc] sm:$0xf]
      %v507 = vld [vmem:[%s1 + $0xd0] sm:$0xf]
      %v508 = vld [vmem:[%s1 + $0xd4] sm:$0xf]
      %v509 = vld [vmem:[%s1 + $0xd8] sm:$0xf]
      %v510 = vld [vmem:[%s1 + $0xdc] sm:$0xf]
      %v511 = vld [vmem:[%s1 + $0xe0] sm:$0xf]
      %v512 = vld [vmem:[%s1 + $0xe4] sm:$0xf]
      %v513 = vld [vmem:[%s1 + $0xe8] sm:$0xf]
      %v514 = vld [vmem:[%s1 + $0xec] sm:$0xf]
      %v515 = vld [vmem:[%s1 + $0xf0] sm:$0xf]
      %v516 = vld [vmem:[%s1 + $0xf4] sm:$0xf]
      %v517 = vld [vmem:[%s1 + $0xf8] sm:$0xf]
      %v518 = vld [vmem:[%s1 + $0xfc] sm:$0xf]
      %v519 = vld [vmem:[%s1 + $0x100] sm:$0xf]
      %v520 = vld [vmem:[%s1 + $0x104] sm:$0xf]
      %v521 = vld [vmem:[%s1 + $0x108] sm:$0xf]
      %v522 = vld [vmem:[%s1 + $0x10c] sm:$0xf]
      %v523 = vld [vmem:[%s1 + $0x110] sm:$0xf]
      %v524 = vld [vmem:[%s1 + $0x114] sm:$0xf]
      %v525 = vld [vmem:[%s1 + $0x118] sm:$0xf]
      %v526 = vld [vmem:[%s1 + $0x11c] sm:$0xf]
      %v527 = vld [vmem:[%s1 + $0x120] sm:$0xf]
      %v528 = vld [vmem:[%s1 + $0x124] sm:$0xf]
      %v529 = vld [vmem:[%s1 + $0x128] sm:$0xf]
      %v530 = vld [vmem:[%s1 + $0x12c] sm:$0xf]
      %v531 = vld [vmem:[%s1 + $0x130] sm:$0xf]
      %v532 = vld [vmem:[%s1 + $0x134] sm:$0xf]
      %v533 = vld [vmem:[%s1 + $0x138] sm:$0xf]
      %v534 = vld [vmem:[%s1 + $0x13c] sm:$0xf]
      %v535 = vld [vmem:[%s1 + $0x140] sm:$0xf]
      %v536 = vld [vmem:[%s1 + $0x144] sm:$0xf]
      %v537 = vld [vmem:[%s1 + $0x148] sm:$0xf]
      %v538 = vld [vmem:[%s1 + $0x14c] sm:$0xf]
      %v539 = vld [vmem:[%s1 + $0x150] sm:$0xf]
      %v540 = vld [vmem:[%s1 + $0x154] sm:$0xf]
      %v541 = vld [vmem:[%s1 + $0x158] sm:$0xf]
      %v542 = vld [vmem:[%s1 + $0x15c] sm:$0xf]
      %v543 = vld [vmem:[%s1 + $0x160] sm:$0xf]
      %v544 = vld [vmem:[%s1 + $0x164] sm:$0xf]
      %v545 = vld [vmem:[%s1 + $0x168] sm:$0xf]
      %v546 = vld [vmem:[%s1 + $0x16c] sm:$0xf]
      %v547 = vld [vmem:[%s1 + $0x170] sm:$0xf]
      %v548 = vld [vmem:[%s1 + $0x174] sm:$0xf]
      %v549 = vld [vmem:[%s1 + $0x178] sm:$0xf]
      %v550 = vld [vmem:[%s1 + $0x17c] sm:$0xf]
      %v551 = vpack.c.b16 %v418, %v415
      %v552 = vpack.c.b16 %v419, %v416
      %v553 = vpack.c.b16 %v420, %v417
      %v554 = vpack.c.b16 %v424, %v421
      %v555 = vpack.c.b16 %v425, %v422
      %v556 = vpack.c.b16 %v426, %v423
      %v557 = vpack.c.b16 %v430, %v427
      %v558 = vpack.c.b16 %v431, %v428
      %v559 = vpack.c.b16 %v432, %v429
      %v560 = vpack.c.b16 %v500, %v433
      %v561 = vpack.c.b16 %v501, %v434
      %v562 = vpack.c.b16 %v502, %v435
      %v623 = vunpack.c.l.b16 %v503
      %v624 = vunpack.c.l.b16 %v504
      %v625 = vunpack.c.l.b16 %v505
      %v626 = vunpack.c.l.b16 %v506
      %v627 = vunpack.c.l.b16 %v507
      %v628 = vunpack.c.l.b16 %v508
      %v629 = vunpack.c.l.b16 %v509
      %v630 = vunpack.c.l.b16 %v510
      %v631 = vunpack.c.l.b16 %v511
      %v632 = vunpack.c.l.b16 %v512
      %v633 = vunpack.c.l.b16 %v513
      %v634 = vunpack.c.l.b16 %v514
      %v635 = vunpack.c.l.b16 %v515
      %v636 = vunpack.c.l.b16 %v516
      %v637 = vunpack.c.l.b16 %v517
      %v638 = vunpack.c.l.b16 %v518
      %v639 = vunpack.c.l.b16 %v519
      %v640 = vunpack.c.l.b16 %v520
      %v641 = vunpack.c.l.b16 %v521
      %v642 = vunpack.c.l.b16 %v522
      %v643 = vunpack.c.l.b16 %v523
      %v644 = vunpack.c.l.b16 %v524
      %v645 = vunpack.c.l.b16 %v525
      %v646 = vunpack.c.l.b16 %v526
      %v647 = vunpack.c.l.b16 %v527
      %v648 = vunpack.c.l.b16 %v528
      %v649 = vunpack.c.l.b16 %v529
      %v650 = vunpack.c.l.b16 %v530
      %v651 = vunpack.c.l.b16 %v531
      %v652 = vunpack.c.l.b16 %v532
      %v653 = vunpack.c.l.b16 %v533
      %v654 = vunpack.c.l.b16 %v534
      %v655 = vunpack.c.l.b16 %v535
      %v656 = vunpack.c.l.b16 %v536
      %v657 = vunpack.c.l.b16 %v537
      %v658 = vunpack.c.l.b16 %v538
      %v659 = vunpack.c.l.b16 %v539
      %v660 = vunpack.c.l.b16 %v540
      %v661 = vunpack.c.l.b16 %v541
      %v662 = vunpack.c.l.b16 %v542
      %v663 = vunpack.c.l.b16 %v543
      %v664 = vunpack.c.l.b16 %v544
      %v665 = vunpack.c.l.b16 %v545
      %v666 = vunpack.c.l.b16 %v546
      %v667 = vunpack.c.l.b16 %v547
      %v668 = vunpack.c.l.b16 %v548
      %v669 = vunpack.c.l.b16 %v549
      %v670 = vunpack.c.l.b16 %v550
      %v671 = vpack.c.b16 %v624, %v623
      %v672 = vpack.c.b16 %v626, %v625
      %v673 = vpack.c.b16 %v628, %v627
      %v674 = vpack.c.b16 %v630, %v629
      %v675 = vpack.c.b16 %v632, %v631
      %v676 = vpack.c.b16 %v634, %v633
      %v677 = vpack.c.b16 %v636, %v635
      %v678 = vpack.c.b16 %v638, %v637
      %v679 = vpack.c.b16 %v640, %v639
      %v680 = vpack.c.b16 %v642, %v641
      %v681 = vpack.c.b16 %v644, %v643
      %v682 = vpack.c.b16 %v646, %v645
      %v683 = vpack.c.b16 %v648, %v647
      %v684 = vpack.c.b16 %v650, %v649
      %v685 = vpack.c.b16 %v652, %v651
      %v686 = vpack.c.b16 %v654, %v653
      %v687 = vpack.c.b16 %v656, %v655
      %v688 = vpack.c.b16 %v658, %v657
      %v689 = vpack.c.b16 %v660, %v659
      %v690 = vpack.c.b16 %v662, %v661
      %v691 = vpack.c.b16 %v664, %v663
      %v692 = vpack.c.b16 %v666, %v665
      %v693 = vpack.c.b16 %v668, %v667
      %v694 = vpack.c.b16 %v670, %v669
      %719 = vmatprep.subr.bf16.mxu0 0
      %720 = vmatpush1.bf16.msra.mxu0 %v678
      %721 = vmatprep.subr.bf16.mxu0 0
      %722 = vmatpush1.bf16.msra.mxu0 %v677
      %723 = vmatprep.subr.bf16.mxu0 0
      %724 = vmatpush1.bf16.msra.mxu0 %v676
      %725 = vmatprep.subr.bf16.mxu0 0
      %726 = vmatpush1.bf16.msra.mxu0 %v675
      %727 = vmatprep.subr.bf16.mxu0 0
      %728 = vmatpush1.bf16.msra.mxu0 %v674
      %729 = vmatprep.subr.bf16.mxu0 0
      %730 = vmatpush1.bf16.msra.mxu0 %v673
      %731 = vmatprep.subr.bf16.mxu0 0
      %732 = vmatpush1.bf16.msra.mxu0 %v672
      %733 = vmatprep.subr.bf16.mxu0 0
      %734 = vmatpush1.bf16.msra.mxu0 %v671
      %735 = vmatprep.subr.bf16.mxu0 0
      %736 = vmatpush2.bf16.msra.mxu0 %v686
      %737 = vmatprep.subr.bf16.mxu0 0
      %738 = vmatpush2.bf16.msra.mxu0 %v685
      %739 = vmatprep.subr.bf16.mxu0 0
      %740 = vmatpush2.bf16.msra.mxu0 %v684
      %741 = vmatprep.subr.bf16.mxu0 0
      %742 = vmatpush2.bf16.msra.mxu0 %v683
      %743 = vmatprep.subr.bf16.mxu0 0
      %744 = vmatpush2.bf16.msra.mxu0 %v682
      %745 = vmatprep.subr.bf16.mxu0 0
      %746 = vmatpush2.bf16.msra.mxu0 %v681
      %747 = vmatprep.subr.bf16.mxu0 0
      %748 = vmatpush2.bf16.msra.mxu0 %v680
      %749 = vmatprep.subr.bf16.mxu0 0
      %750 = vmatpush2.bf16.msra.mxu0 %v679
      %751 = vmatprep.mubr.bf16.mxu0 %v552
      %752 = vmatmul.mubr.bf16.gmra.mxu0 %v551
      %v753 = vpop.f32.mrf.mxu0
      %v754 = vadd.f32 0.0, %v753
      %v755 = vpop.f32.mrf.mxu0
      %v756 = vpop.f32.mrf.mxu0
      %v757 = vadd.f32 0.0, %v756
      %v758 = vpop.f32.mrf.mxu0
      %759 = vmatprep.mubr.bf16.mxu0 %v555
      %760 = vmatmul.mubr.bf16.gmra.mxu0 %v554
      %v761 = vpop.f32.mrf.mxu0
      %v762 = vadd.f32 0.0, %v761
      %v763 = vpop.f32.mrf.mxu0
      %v764 = vpop.f32.mrf.mxu0
      %v765 = vadd.f32 0.0, %v764
      %v766 = vpop.f32.mrf.mxu0
      %767 = vmatprep.mubr.bf16.mxu0 %v558
      %768 = vmatmul.mubr.bf16.gmra.mxu0 %v557
      %v769 = vpop.f32.mrf.mxu0
      %v770 = vadd.f32 0.0, %v769
      %v771 = vpop.f32.mrf.mxu0
      %v772 = vpop.f32.mrf.mxu0
      %v773 = vadd.f32 0.0, %v772
      %v774 = vpop.f32.mrf.mxu0
      %775 = vmatprep.mubr.bf16.mxu0 %v561
      %776 = vmatmul.mubr.bf16.gmra.mxu0 %v560
      %v777 = vpop.f32.mrf.mxu0
      %v778 = vadd.f32 0.0, %v777
      %v779 = vpop.f32.mrf.mxu0
      %v780 = vpop.f32.mrf.mxu0
      %v781 = vadd.f32 0.0, %v780
      %v782 = vpop.f32.mrf.mxu0
      %783 = vdwg.mxu0
      %784 = vmatprep.subr.bf16.mxu0 0
      %785 = vmatpush1.bf16.msra.mxu0 %v694
      %786 = vmatprep.subr.bf16.mxu0 0
      %787 = vmatpush1.bf16.msra.mxu0 %v693
      %788 = vmatprep.subr.bf16.mxu0 0
      %789 = vmatpush1.bf16.msra.mxu0 %v692
      %790 = vmatprep.subr.bf16.mxu0 0
      %791 = vmatpush1.bf16.msra.mxu0 %v691
      %792 = vmatprep.subr.bf16.mxu0 0
      %793 = vmatpush1.bf16.msra.mxu0 %v690
      %794 = vmatprep.subr.bf16.mxu0 0
      %795 = vmatpush1.bf16.msra.mxu0 %v689
      %796 = vmatprep.subr.bf16.mxu0 0
      %797 = vmatpush1.bf16.msra.mxu0 %v688
      %798 = vmatprep.subr.bf16.mxu0 0
      %799 = vmatpush1.bf16.msra.mxu0 %v687
      %800 = vmatprep.subr.bf16.mxu0 0
      %801 = vmatpush2.bf16.msra.mxu0 0
      %802 = vmatprep.subr.bf16.mxu0 0
      %803 = vmatpush2.bf16.msra.mxu0 0
      %804 = vmatprep.subr.bf16.mxu0 0
      %805 = vmatpush2.bf16.msra.mxu0 0
      %806 = vmatprep.subr.bf16.mxu0 0
      %807 = vmatpush2.bf16.msra.mxu0 0
      %808 = vmatprep.subr.bf16.mxu0 0
      %809 = vmatpush2.bf16.msra.mxu0 0
      %810 = vmatprep.subr.bf16.mxu0 0
      %811 = vmatpush2.bf16.msra.mxu0 0
      %812 = vmatprep.subr.bf16.mxu0 0
      %813 = vmatpush2.bf16.msra.mxu0 0
      %814 = vmatprep.subr.bf16.mxu0 0
      %815 = vmatpush2.bf16.msra.mxu0 0
      %816 = vmatprep.mubr.bf16.mxu0 0
      %817 = vmatmul.mubr.bf16.gmra.mxu0 %v553
      %v818 = vpop.f32.mrf.mxu0
      %v819 = vadd.f32 %v754, %v818
      %v820 = vpop.f32.mrf.mxu0
      %v821 = vpop.f32.mrf.mxu0
      %v822 = vadd.f32 %v757, %v821
      %v823 = vpop.f32.mrf.mxu0
      %824 = vmatprep.mubr.bf16.mxu0 0
      %825 = vmatmul.mubr.bf16.gmra.mxu0 %v556
      %v826 = vpop.f32.mrf.mxu0
      %v827 = vadd.f32 %v762, %v826
      %v828 = vpop.f32.mrf.mxu0
      %v829 = vpop.f32.mrf.mxu0
      %v830 = vadd.f32 %v765, %v829
      %v831 = vpop.f32.mrf.mxu0
      %832 = vmatprep.mubr.bf16.mxu0 0
      %833 = vmatmul.mubr.bf16.gmra.mxu0 %v559
      %v834 = vpop.f32.mrf.mxu0
      %v835 = vadd.f32 %v770, %v834
      %v836 = vpop.f32.mrf.mxu0
      %v837 = vpop.f32.mrf.mxu0
      %v838 = vadd.f32 %v773, %v837
      %v839 = vpop.f32.mrf.mxu0
      %840 = vmatprep.mubr.bf16.mxu0 0
      %841 = vmatmul.mubr.bf16.gmra.mxu0 %v562
      %v842 = vpop.f32.mrf.mxu0
      %v843 = vadd.f32 %v778, %v842
      %v844 = vpop.f32.mrf.mxu0
      %v845 = vpop.f32.mrf.mxu0
      %v846 = vadd.f32 %v781, %v845
      %v847 = vpop.f32.mrf.mxu0
      %848 = vdwg.mxu0
      %v849 = vpack.c.b16 %v415, %v412
      %v850 = vpack.c.b16 %v416, %v413
      %v851 = vpack.c.b16 %v417, %v414
      %v852 = vpack.c.b16 %v421, %v418
      %v853 = vpack.c.b16 %v422, %v419
      %v854 = vpack.c.b16 %v423, %v420
      %v855 = vpack.c.b16 %v427, %v424
      %v856 = vpack.c.b16 %v428, %v425
      %v857 = vpack.c.b16 %v429, %v426
      %v858 = vpack.c.b16 %v433, %v430
      %v859 = vpack.c.b16 %v434, %v431
      %v860 = vpack.c.b16 %v435, %v432
      %v921 = vunpack.c.l.b16 %v436
      %v922 = vunpack.c.l.b16 %v437
      %v923 = vunpack.c.l.b16 %v438
      %v924 = vunpack.c.l.b16 %v439
      %v925 = vunpack.c.l.b16 %v440
      %v926 = vunpack.c.l.b16 %v441
      %v927 = vunpack.c.l.b16 %v442
      %v928 = vunpack.c.l.b16 %v443
      %v929 = vunpack.c.l.b16 %v444
      %v930 = vunpack.c.l.b16 %v445
      %v931 = vunpack.c.l.b16 %v446
      %v932 = vunpack.c.l.b16 %v447
      %v933 = vunpack.c.l.b16 %v448
      %v934 = vunpack.c.l.b16 %v449
      %v935 = vunpack.c.l.b16 %v450
      %v936 = vunpack.c.l.b16 %v451
      %v937 = vunpack.c.l.b16 %v452
      %v938 = vunpack.c.l.b16 %v453
      %v939 = vunpack.c.l.b16 %v454
      %v940 = vunpack.c.l.b16 %v455
      %v941 = vunpack.c.l.b16 %v456
      %v942 = vunpack.c.l.b16 %v457
      %v943 = vunpack.c.l.b16 %v458
      %v944 = vunpack.c.l.b16 %v459
      %v945 = vunpack.c.l.b16 %v460
      %v946 = vunpack.c.l.b16 %v461
      %v947 = vunpack.c.l.b16 %v462
      %v948 = vunpack.c.l.b16 %v463
      %v949 = vunpack.c.l.b16 %v464
      %v950 = vunpack.c.l.b16 %v465
      %v951 = vunpack.c.l.b16 %v466
      %v952 = vunpack.c.l.b16 %v467
      %v953 = vunpack.c.l.b16 %v468
      %v954 = vunpack.c.l.b16 %v469
      %v955 = vunpack.c.l.b16 %v470
      %v956 = vunpack.c.l.b16 %v471
      %v957 = vunpack.c.l.b16 %v472
      %v958 = vunpack.c.l.b16 %v473
      %v959 = vunpack.c.l.b16 %v474
      %v960 = vunpack.c.l.b16 %v475
      %v961 = vunpack.c.l.b16 %v476
      %v962 = vunpack.c.l.b16 %v477
      %v963 = vunpack.c.l.b16 %v478
      %v964 = vunpack.c.l.b16 %v479
      %v965 = vunpack.c.l.b16 %v480
      %v966 = vunpack.c.l.b16 %v481
      %v967 = vunpack.c.l.b16 %v482
      %v968 = vunpack.c.l.b16 %v483
      %v969 = vpack.c.b16 %v922, %v921
      %v970 = vpack.c.b16 %v924, %v923
      %v971 = vpack.c.b16 %v926, %v925
      %v972 = vpack.c.b16 %v928, %v927
      %v973 = vpack.c.b16 %v930, %v929
      %v974 = vpack.c.b16 %v932, %v931
      %v975 = vpack.c.b16 %v934, %v933
      %v976 = vpack.c.b16 %v936, %v935
      %v977 = vpack.c.b16 %v938, %v937
      %v978 = vpack.c.b16 %v940, %v939
      %v979 = vpack.c.b16 %v942, %v941
      %v980 = vpack.c.b16 %v944, %v943
      %v981 = vpack.c.b16 %v946, %v945
      %v982 = vpack.c.b16 %v948, %v947
      %v983 = vpack.c.b16 %v950, %v949
      %v984 = vpack.c.b16 %v952, %v951
      %v985 = vpack.c.b16 %v954, %v953
      %v986 = vpack.c.b16 %v956, %v955
      %v987 = vpack.c.b16 %v958, %v957
      %v988 = vpack.c.b16 %v960, %v959
      %v989 = vpack.c.b16 %v962, %v961
      %v990 = vpack.c.b16 %v964, %v963
      %v991 = vpack.c.b16 %v966, %v965
      %v992 = vpack.c.b16 %v968, %v967
      %1017 = vmatprep.subr.bf16.mxu0 0
      %1018 = vmatpush1.bf16.msra.mxu0 %v976
      %1019 = vmatprep.subr.bf16.mxu0 0
      %1020 = vmatpush1.bf16.msra.mxu0 %v975
      %1021 = vmatprep.subr.bf16.mxu0 0
      %1022 = vmatpush1.bf16.msra.mxu0 %v974
      %1023 = vmatprep.subr.bf16.mxu0 0
      %1024 = vmatpush1.bf16.msra.mxu0 %v973
      %1025 = vmatprep.subr.bf16.mxu0 0
      %1026 = vmatpush1.bf16.msra.mxu0 %v972
      %1027 = vmatprep.subr.bf16.mxu0 0
      %1028 = vmatpush1.bf16.msra.mxu0 %v971
      %1029 = vmatprep.subr.bf16.mxu0 0
      %1030 = vmatpush1.bf16.msra.mxu0 %v970
      %1031 = vmatprep.subr.bf16.mxu0 0
      %1032 = vmatpush1.bf16.msra.mxu0 %v969
      %1033 = vmatprep.subr.bf16.mxu0 0
      %1034 = vmatpush2.bf16.msra.mxu0 %v984
      %1035 = vmatprep.subr.bf16.mxu0 0
      %1036 = vmatpush2.bf16.msra.mxu0 %v983
      %1037 = vmatprep.subr.bf16.mxu0 0
      %1038 = vmatpush2.bf16.msra.mxu0 %v982
      %1039 = vmatprep.subr.bf16.mxu0 0
      %1040 = vmatpush2.bf16.msra.mxu0 %v981
      %1041 = vmatprep.subr.bf16.mxu0 0
      %1042 = vmatpush2.bf16.msra.mxu0 %v980
      %1043 = vmatprep.subr.bf16.mxu0 0
      %1044 = vmatpush2.bf16.msra.mxu0 %v979
      %1045 = vmatprep.subr.bf16.mxu0 0
      %1046 = vmatpush2.bf16.msra.mxu0 %v978
      %1047 = vmatprep.subr.bf16.mxu0 0
      %1048 = vmatpush2.bf16.msra.mxu0 %v977
      %1049 = vmatprep.mubr.bf16.mxu0 %v850
      %1050 = vmatmul.mubr.bf16.gmra.mxu0 %v849
      %v1051 = vpop.f32.mrf.mxu0
      %v1052 = vadd.f32 %v819, %v1051
      %v1053 = vpop.f32.mrf.mxu0
      %v1054 = vpop.f32.mrf.mxu0
      %v1055 = vadd.f32 %v822, %v1054
      %v1056 = vpop.f32.mrf.mxu0
      %1057 = vmatprep.mubr.bf16.mxu0 %v853
      %1058 = vmatmul.mubr.bf16.gmra.mxu0 %v852
      %v1059 = vpop.f32.mrf.mxu0
      %v1060 = vadd.f32 %v827, %v1059
      %v1061 = vpop.f32.mrf.mxu0
      %v1062 = vpop.f32.mrf.mxu0
      %v1063 = vadd.f32 %v830, %v1062
      %v1064 = vpop.f32.mrf.mxu0
      %1065 = vmatprep.mubr.bf16.mxu0 %v856
      %1066 = vmatmul.mubr.bf16.gmra.mxu0 %v855
      %v1067 = vpop.f32.mrf.mxu0
      %v1068 = vadd.f32 %v835, %v1067
      %v1069 = vpop.f32.mrf.mxu0
      %v1070 = vpop.f32.mrf.mxu0
      %v1071 = vadd.f32 %v838, %v1070
      %v1072 = vpop.f32.mrf.mxu0
      %1073 = vmatprep.mubr.bf16.mxu0 %v859
      %1074 = vmatmul.mubr.bf16.gmra.mxu0 %v858
      %v1075 = vpop.f32.mrf.mxu0
      %v1076 = vadd.f32 %v843, %v1075
      %v1077 = vpop.f32.mrf.mxu0
      %v1078 = vpop.f32.mrf.mxu0
      %v1079 = vadd.f32 %v846, %v1078
      %v1080 = vpop.f32.mrf.mxu0
      %1081 = vdwg.mxu0
      %1082 = vmatprep.subr.bf16.mxu0 0
      %1083 = vmatpush1.bf16.msra.mxu0 %v992
      %1084 = vmatprep.subr.bf16.mxu0 0
      %1085 = vmatpush1.bf16.msra.mxu0 %v991
      %1086 = vmatprep.subr.bf16.mxu0 0
      %1087 = vmatpush1.bf16.msra.mxu0 %v990
      %1088 = vmatprep.subr.bf16.mxu0 0
      %1089 = vmatpush1.bf16.msra.mxu0 %v989
      %1090 = vmatprep.subr.bf16.mxu0 0
      %1091 = vmatpush1.bf16.msra.mxu0 %v988
      %1092 = vmatprep.subr.bf16.mxu0 0
      %1093 = vmatpush1.bf16.msra.mxu0 %v987
      %1094 = vmatprep.subr.bf16.mxu0 0
      %1095 = vmatpush1.bf16.msra.mxu0 %v986
      %1096 = vmatprep.subr.bf16.mxu0 0
      %1097 = vmatpush1.bf16.msra.mxu0 %v985
      %1098 = vmatprep.subr.bf16.mxu0 0
      %1099 = vmatpush2.bf16.msra.mxu0 0
      %1100 = vmatprep.subr.bf16.mxu0 0
      %1101 = vmatpush2.bf16.msra.mxu0 0
      %1102 = vmatprep.subr.bf16.mxu0 0
      %1103 = vmatpush2.bf16.msra.mxu0 0
      %1104 = vmatprep.subr.bf16.mxu0 0
      %1105 = vmatpush2.bf16.msra.mxu0 0
      %1106 = vmatprep.subr.bf16.mxu0 0
      %1107 = vmatpush2.bf16.msra.mxu0 0
      %1108 = vmatprep.subr.bf16.mxu0 0
      %1109 = vmatpush2.bf16.msra.mxu0 0
      %1110 = vmatprep.subr.bf16.mxu0 0
      %1111 = vmatpush2.bf16.msra.mxu0 0
      %1112 = vmatprep.subr.bf16.mxu0 0
      %1113 = vmatpush2.bf16.msra.mxu0 0
      %1114 = vmatprep.mubr.bf16.mxu0 0
      %1115 = vmatmul.mubr.bf16.gmra.mxu0 %v851
      %v1116 = vpop.f32.mrf.mxu0
      %v1117 = vadd.f32 %v1052, %v1116
      %v1118 = vpop.f32.mrf.mxu0
      %v1119 = vpop.f32.mrf.mxu0
      %v1120 = vadd.f32 %v1055, %v1119
      %v1121 = vpop.f32.mrf.mxu0
      %1122 = vmatprep.mubr.bf16.mxu0 0
      %1123 = vmatmul.mubr.bf16.gmra.mxu0 %v854
      %v1124 = vpop.f32.mrf.mxu0
      %v1125 = vadd.f32 %v1060, %v1124
      %v1126 = vpop.f32.mrf.mxu0
      %v1127 = vpop.f32.mrf.mxu0
      %v1128 = vadd.f32 %v1063, %v1127
      %v1129 = vpop.f32.mrf.mxu0
      %1130 = vmatprep.mubr.bf16.mxu0 0
      %1131 = vmatmul.mubr.bf16.gmra.mxu0 %v857
      %v1132 = vpop.f32.mrf.mxu0
      %v1133 = vadd.f32 %v1068, %v1132
      %v1134 = vpop.f32.mrf.mxu0
      %v1135 = vpop.f32.mrf.mxu0
      %v1136 = vadd.f32 %v1071, %v1135
      %v1137 = vpop.f32.mrf.mxu0
      %1138 = vmatprep.mubr.bf16.mxu0 0
      %1139 = vmatmul.mubr.bf16.gmra.mxu0 %v860
      %v1140 = vpop.f32.mrf.mxu0
      %v1141 = vadd.f32 %v1076, %v1140
      %v1142 = vpop.f32.mrf.mxu0
      %v1143 = vpop.f32.mrf.mxu0
      %v1144 = vadd.f32 %v1079, %v1143
      %v1145 = vpop.f32.mrf.mxu0
      %1146 = vdwg.mxu0
      %v1147 = vld [vmem:[%s1 + $0x180] sm:$0xf]
      %v1148 = vld [vmem:[%s1 + $0x184] sm:$0xf]
      %v1149 = vld [vmem:[%s1 + $0x188] sm:$0xf]
      %v1150 = vld [vmem:[%s1 + $0x18c] sm:$0xf]
      %v1151 = vld [vmem:[%s1 + $0x190] sm:$0xf]
      %v1152 = vld [vmem:[%s1 + $0x194] sm:$0xf]
      %v1153 = vld [vmem:[%s1 + $0x198] sm:$0xf]
      %v1154 = vld [vmem:[%s1 + $0x19c] sm:$0xf]
      %v1155 = vld [vmem:[%s1 + $0x1a0] sm:$0xf]
      %v1156 = vld [vmem:[%s1 + $0x1a4] sm:$0xf]
      %v1157 = vld [vmem:[%s1 + $0x1a8] sm:$0xf]
      %v1158 = vld [vmem:[%s1 + $0x1ac] sm:$0xf]
      %v1159 = vld [vmem:[%s1 + $0x1b0] sm:$0xf]
      %v1160 = vld [vmem:[%s1 + $0x1b4] sm:$0xf]
      %v1161 = vld [vmem:[%s1 + $0x1b8] sm:$0xf]
      %v1162 = vld [vmem:[%s1 + $0x1bc] sm:$0xf]
      %v1163 = vld [vmem:[%s1 + $0x1c0] sm:$0xf]
      %v1164 = vld [vmem:[%s1 + $0x1c4] sm:$0xf]
      %v1165 = vld [vmem:[%s1 + $0x1c8] sm:$0xf]
      %v1166 = vld [vmem:[%s1 + $0x1cc] sm:$0xf]
      %v1167 = vld [vmem:[%s1 + $0x1d0] sm:$0xf]
      %v1168 = vld [vmem:[%s1 + $0x1d4] sm:$0xf]
      %v1169 = vld [vmem:[%s1 + $0x1d8] sm:$0xf]
      %v1170 = vld [vmem:[%s1 + $0x1dc] sm:$0xf]
      %v1171 = vld [vmem:[%s1 + $0x1e0] sm:$0xf]
      %v1172 = vld [vmem:[%s1 + $0x1e4] sm:$0xf]
      %v1173 = vld [vmem:[%s1 + $0x1e8] sm:$0xf]
      %v1174 = vld [vmem:[%s1 + $0x1ec] sm:$0xf]
      %v1175 = vld [vmem:[%s1 + $0x1f0] sm:$0xf]
      %v1176 = vld [vmem:[%s1 + $0x1f4] sm:$0xf]
      %v1177 = vld [vmem:[%s1 + $0x1f8] sm:$0xf]
      %v1178 = vld [vmem:[%s1 + $0x1fc] sm:$0xf]
      %v1179 = vld [vmem:[%s1 + $0x200] sm:$0xf]
      %v1180 = vld [vmem:[%s1 + $0x204] sm:$0xf]
      %v1181 = vld [vmem:[%s1 + $0x208] sm:$0xf]
      %v1182 = vld [vmem:[%s1 + $0x20c] sm:$0xf]
      %v1183 = vld [vmem:[%s1 + $0x210] sm:$0xf]
      %v1184 = vld [vmem:[%s1 + $0x214] sm:$0xf]
      %v1185 = vld [vmem:[%s1 + $0x218] sm:$0xf]
      %v1186 = vld [vmem:[%s1 + $0x21c] sm:$0xf]
      %v1187 = vld [vmem:[%s1 + $0x220] sm:$0xf]
      %v1188 = vld [vmem:[%s1 + $0x224] sm:$0xf]
      %v1189 = vld [vmem:[%s1 + $0x228] sm:$0xf]
      %v1190 = vld [vmem:[%s1 + $0x22c] sm:$0xf]
      %v1191 = vld [vmem:[%s1 + $0x230] sm:$0xf]
      %v1192 = vld [vmem:[%s1 + $0x234] sm:$0xf]
      %v1193 = vld [vmem:[%s1 + $0x238] sm:$0xf]
      %v1194 = vld [vmem:[%s1 + $0x23c] sm:$0xf]
      %v1195 = vpack.c.b16 %v412, %v500
      %v1196 = vpack.c.b16 %v413, %v501
      %v1197 = vpack.c.b16 %v414, %v502
      %v1249 = vunpack.c.l.b16 %v1147
      %v1250 = vunpack.c.l.b16 %v1148
      %v1251 = vunpack.c.l.b16 %v1149
      %v1252 = vunpack.c.l.b16 %v1150
      %v1253 = vunpack.c.l.b16 %v1151
      %v1254 = vunpack.c.l.b16 %v1152
      %v1255 = vunpack.c.l.b16 %v1153
      %v1256 = vunpack.c.l.b16 %v1154
      %v1257 = vunpack.c.l.b16 %v1155
      %v1258 = vunpack.c.l.b16 %v1156
      %v1259 = vunpack.c.l.b16 %v1157
      %v1260 = vunpack.c.l.b16 %v1158
      %v1261 = vunpack.c.l.b16 %v1159
      %v1262 = vunpack.c.l.b16 %v1160
      %v1263 = vunpack.c.l.b16 %v1161
      %v1264 = vunpack.c.l.b16 %v1162
      %v1265 = vunpack.c.l.b16 %v1163
      %v1266 = vunpack.c.l.b16 %v1164
      %v1267 = vunpack.c.l.b16 %v1165
      %v1268 = vunpack.c.l.b16 %v1166
      %v1269 = vunpack.c.l.b16 %v1167
      %v1270 = vunpack.c.l.b16 %v1168
      %v1271 = vunpack.c.l.b16 %v1169
      %v1272 = vunpack.c.l.b16 %v1170
      %v1273 = vunpack.c.l.b16 %v1171
      %v1274 = vunpack.c.l.b16 %v1172
      %v1275 = vunpack.c.l.b16 %v1173
      %v1276 = vunpack.c.l.b16 %v1174
      %v1277 = vunpack.c.l.b16 %v1175
      %v1278 = vunpack.c.l.b16 %v1176
      %v1279 = vunpack.c.l.b16 %v1177
      %v1280 = vunpack.c.l.b16 %v1178
      %v1281 = vunpack.c.l.b16 %v1179
      %v1282 = vunpack.c.l.b16 %v1180
      %v1283 = vunpack.c.l.b16 %v1181
      %v1284 = vunpack.c.l.b16 %v1182
      %v1285 = vunpack.c.l.b16 %v1183
      %v1286 = vunpack.c.l.b16 %v1184
      %v1287 = vunpack.c.l.b16 %v1185
      %v1288 = vunpack.c.l.b16 %v1186
      %v1289 = vunpack.c.l.b16 %v1187
      %v1290 = vunpack.c.l.b16 %v1188
      %v1291 = vunpack.c.l.b16 %v1189
      %v1292 = vunpack.c.l.b16 %v1190
      %v1293 = vunpack.c.l.b16 %v1191
      %v1294 = vunpack.c.l.b16 %v1192
      %v1295 = vunpack.c.l.b16 %v1193
      %v1296 = vunpack.c.l.b16 %v1194
      %v1297 = vpack.c.b16 %v1250, %v1249
      %v1298 = vpack.c.b16 %v1252, %v1251
      %v1299 = vpack.c.b16 %v1254, %v1253
      %v1300 = vpack.c.b16 %v1256, %v1255
      %v1301 = vpack.c.b16 %v1258, %v1257
      %v1302 = vpack.c.b16 %v1260, %v1259
      %v1303 = vpack.c.b16 %v1262, %v1261
      %v1304 = vpack.c.b16 %v1264, %v1263
      %v1305 = vpack.c.b16 %v1266, %v1265
      %v1306 = vpack.c.b16 %v1268, %v1267
      %v1307 = vpack.c.b16 %v1270, %v1269
      %v1308 = vpack.c.b16 %v1272, %v1271
      %v1309 = vpack.c.b16 %v1274, %v1273
      %v1310 = vpack.c.b16 %v1276, %v1275
      %v1311 = vpack.c.b16 %v1278, %v1277
      %v1312 = vpack.c.b16 %v1280, %v1279
      %v1313 = vpack.c.b16 %v1282, %v1281
      %v1314 = vpack.c.b16 %v1284, %v1283
      %v1315 = vpack.c.b16 %v1286, %v1285
      %v1316 = vpack.c.b16 %v1288, %v1287
      %v1317 = vpack.c.b16 %v1290, %v1289
      %v1318 = vpack.c.b16 %v1292, %v1291
      %v1319 = vpack.c.b16 %v1294, %v1293
      %v1320 = vpack.c.b16 %v1296, %v1295
      %1345 = vmatprep.subr.bf16.mxu0 0
      %1346 = vmatpush1.bf16.msra.mxu0 %v1304
      %1347 = vmatprep.subr.bf16.mxu0 0
      %1348 = vmatpush1.bf16.msra.mxu0 %v1303
      %1349 = vmatprep.subr.bf16.mxu0 0
      %1350 = vmatpush1.bf16.msra.mxu0 %v1302
      %1351 = vmatprep.subr.bf16.mxu0 0
      %1352 = vmatpush1.bf16.msra.mxu0 %v1301
      %1353 = vmatprep.subr.bf16.mxu0 0
      %1354 = vmatpush1.bf16.msra.mxu0 %v1300
      %1355 = vmatprep.subr.bf16.mxu0 0
      %1356 = vmatpush1.bf16.msra.mxu0 %v1299
      %1357 = vmatprep.subr.bf16.mxu0 0
      %1358 = vmatpush1.bf16.msra.mxu0 %v1298
      %1359 = vmatprep.subr.bf16.mxu0 0
      %1360 = vmatpush1.bf16.msra.mxu0 %v1297
      %1361 = vmatprep.subr.bf16.mxu0 0
      %1362 = vmatpush2.bf16.msra.mxu0 %v1312
      %1363 = vmatprep.subr.bf16.mxu0 0
      %1364 = vmatpush2.bf16.msra.mxu0 %v1311
      %1365 = vmatprep.subr.bf16.mxu0 0
      %1366 = vmatpush2.bf16.msra.mxu0 %v1310
      %1367 = vmatprep.subr.bf16.mxu0 0
      %1368 = vmatpush2.bf16.msra.mxu0 %v1309
      %1369 = vmatprep.subr.bf16.mxu0 0
      %1370 = vmatpush2.bf16.msra.mxu0 %v1308
      %1371 = vmatprep.subr.bf16.mxu0 0
      %1372 = vmatpush2.bf16.msra.mxu0 %v1307
      %1373 = vmatprep.subr.bf16.mxu0 0
      %1374 = vmatpush2.bf16.msra.mxu0 %v1306
      %1375 = vmatprep.subr.bf16.mxu0 0
      %1376 = vmatpush2.bf16.msra.mxu0 %v1305
      %1377 = vmatprep.mubr.bf16.mxu0 %v853
      %1378 = vmatmul.mubr.bf16.gmra.mxu0 %v852
      %v1379 = vpop.f32.mrf.mxu0
      %v1380 = vadd.f32 0.0, %v1379
      %v1381 = vpop.f32.mrf.mxu0
      %v1382 = vpop.f32.mrf.mxu0
      %v1383 = vadd.f32 0.0, %v1382
      %v1384 = vpop.f32.mrf.mxu0
      %1385 = vmatprep.mubr.bf16.mxu0 %v856
      %1386 = vmatmul.mubr.bf16.gmra.mxu0 %v855
      %v1387 = vpop.f32.mrf.mxu0
      %v1388 = vadd.f32 0.0, %v1387
      %v1389 = vpop.f32.mrf.mxu0
      %v1390 = vpop.f32.mrf.mxu0
      %v1391 = vadd.f32 0.0, %v1390
      %v1392 = vpop.f32.mrf.mxu0
      %1393 = vmatprep.mubr.bf16.mxu0 %v859
      %1394 = vmatmul.mubr.bf16.gmra.mxu0 %v858
      %v1395 = vpop.f32.mrf.mxu0
      %v1396 = vadd.f32 0.0, %v1395
      %v1397 = vpop.f32.mrf.mxu0
      %v1398 = vpop.f32.mrf.mxu0
      %v1399 = vadd.f32 0.0, %v1398
      %v1400 = vpop.f32.mrf.mxu0
      %1401 = vmatprep.mubr.bf16.mxu0 %v1196
      %1402 = vmatmul.mubr.bf16.gmra.mxu0 %v1195
      %v1403 = vpop.f32.mrf.mxu0
      %v1404 = vadd.f32 0.0, %v1403
      %v1405 = vpop.f32.mrf.mxu0
      %v1406 = vpop.f32.mrf.mxu0
      %v1407 = vadd.f32 0.0, %v1406
      %v1408 = vpop.f32.mrf.mxu0
      %1409 = vdwg.mxu0
      %1410 = vmatprep.subr.bf16.mxu0 0
      %1411 = vmatpush1.bf16.msra.mxu0 %v1320
      %1412 = vmatprep.subr.bf16.mxu0 0
      %1413 = vmatpush1.bf16.msra.mxu0 %v1319
      %1414 = vmatprep.subr.bf16.mxu0 0
      %1415 = vmatpush1.bf16.msra.mxu0 %v1318
      %1416 = vmatprep.subr.bf16.mxu0 0
      %1417 = vmatpush1.bf16.msra.mxu0 %v1317
      %1418 = vmatprep.subr.bf16.mxu0 0
      %1419 = vmatpush1.bf16.msra.mxu0 %v1316
      %1420 = vmatprep.subr.bf16.mxu0 0
      %1421 = vmatpush1.bf16.msra.mxu0 %v1315
      %1422 = vmatprep.subr.bf16.mxu0 0
      %1423 = vmatpush1.bf16.msra.mxu0 %v1314
      %1424 = vmatprep.subr.bf16.mxu0 0
      %1425 = vmatpush1.bf16.msra.mxu0 %v1313
      %1426 = vmatprep.subr.bf16.mxu0 0
      %1427 = vmatpush2.bf16.msra.mxu0 0
      %1428 = vmatprep.subr.bf16.mxu0 0
      %1429 = vmatpush2.bf16.msra.mxu0 0
      %1430 = vmatprep.subr.bf16.mxu0 0
      %1431 = vmatpush2.bf16.msra.mxu0 0
      %1432 = vmatprep.subr.bf16.mxu0 0
      %1433 = vmatpush2.bf16.msra.mxu0 0
      %1434 = vmatprep.subr.bf16.mxu0 0
      %1435 = vmatpush2.bf16.msra.mxu0 0
      %1436 = vmatprep.subr.bf16.mxu0 0
      %1437 = vmatpush2.bf16.msra.mxu0 0
      %1438 = vmatprep.subr.bf16.mxu0 0
      %1439 = vmatpush2.bf16.msra.mxu0 0
      %1440 = vmatprep.subr.bf16.mxu0 0
      %1441 = vmatpush2.bf16.msra.mxu0 0
      %1442 = vmatprep.mubr.bf16.mxu0 0
      %1443 = vmatmul.mubr.bf16.gmra.mxu0 %v854
      %v1444 = vpop.f32.mrf.mxu0
      %v1445 = vadd.f32 %v1380, %v1444
      %v1446 = vpop.f32.mrf.mxu0
      %v1447 = vpop.f32.mrf.mxu0
      %v1448 = vadd.f32 %v1383, %v1447
      %v1449 = vpop.f32.mrf.mxu0
      %1450 = vmatprep.mubr.bf16.mxu0 0
      %1451 = vmatmul.mubr.bf16.gmra.mxu0 %v857
      %v1452 = vpop.f32.mrf.mxu0
      %v1453 = vadd.f32 %v1388, %v1452
      %v1454 = vpop.f32.mrf.mxu0
      %v1455 = vpop.f32.mrf.mxu0
      %v1456 = vadd.f32 %v1391, %v1455
      %v1457 = vpop.f32.mrf.mxu0
      %1458 = vmatprep.mubr.bf16.mxu0 0
      %1459 = vmatmul.mubr.bf16.gmra.mxu0 %v860
      %v1460 = vpop.f32.mrf.mxu0
      %v1461 = vadd.f32 %v1396, %v1460
      %v1462 = vpop.f32.mrf.mxu0
      %v1463 = vpop.f32.mrf.mxu0
      %v1464 = vadd.f32 %v1399, %v1463
      %v1465 = vpop.f32.mrf.mxu0
      %1466 = vmatprep.mubr.bf16.mxu0 0
      %1467 = vmatmul.mubr.bf16.gmra.mxu0 %v1197
      %v1468 = vpop.f32.mrf.mxu0
      %v1469 = vadd.f32 %v1404, %v1468
      %v1470 = vpop.f32.mrf.mxu0
      %v1471 = vpop.f32.mrf.mxu0
      %v1472 = vadd.f32 %v1407, %v1471
      %v1473 = vpop.f32.mrf.mxu0
      %1474 = vdwg.mxu0
      %v1475 = vadd.f32 %v1117, %v1445
      %v1476 = vadd.f32 %v1120, %v1448
      %v1477 = vadd.f32 %v1125, %v1453
      %v1478 = vadd.f32 %v1128, %v1456
      %v1479 = vadd.f32 %v1133, %v1461
      %v1480 = vadd.f32 %v1136, %v1464
      %v1481 = vadd.f32 %v1141, %v1469
      %v1482 = vadd.f32 %v1144, %v1472
      %v1483 = vpack.c.bf16 %v1475, %v1475
      %v1484 = vpack.c.bf16 %v1476, %v1476
      %v1485 = vpack.c.bf16 %v1477, %v1477
      %v1486 = vpack.c.bf16 %v1478, %v1478
      %v1487 = vpack.c.bf16 %v1479, %v1479
      %v1488 = vpack.c.bf16 %v1480, %v1480
      %v1489 = vpack.c.bf16 %v1481, %v1481
      %v1490 = vpack.c.bf16 %v1482, %v1482
      %1491 = vst [vmem:[%s177] sm:$0xf] %v1483
      %1492 = vst [vmem:[%s177 + $0x4] sm:$0xf] %v1484
      %1493 = vst [vmem:[%s177 + $0x8] sm:$0xf] %v1485
      %1494 = vst [vmem:[%s177 + $0xc] sm:$0xf] %v1486
      %1495 = vst [vmem:[%s177 + $0x10] sm:$0xf] %v1487
      %1496 = vst [vmem:[%s177 + $0x14] sm:$0xf] %v1488
      %1497 = vst [vmem:[%s177 + $0x18] sm:$0xf] %v1489
      %1498 = vst [vmem:[%s177 + $0x1c] sm:$0xf] %v1490
      %v1499 = vadd.f32 %v1475, %v1476
      %v1500 = vadd.f32 %v1499, %v1477
      %v1501 = vadd.f32 %v1500, %v1478
      %v1502 = vadd.f32 %v1501, %v1479
      %v1503 = vadd.f32 %v1502, %v1480
      %v1504 = vadd.f32 %v1503, %v1481
      %v1505 = vadd.f32 %v1504, %v1482
      %v1506 = vrot.slane %v1505, 4
      %v1507 = vadd.f32 %v1505, %v1506
      %v1508 = vrot.slane %v1507, 2
      %v1509 = vadd.f32 %v1507, %v1508
      %v1510 = vrot.slane %v1509, 1
      %v1511 = vadd.f32 %v1509, %v1510
      %v1512 = vmul.f32 %v1475, %v1475
      %v1513 = vmul.f32 %v1476, %v1476
      %v1514 = vmul.f32 %v1477, %v1477
      %v1515 = vmul.f32 %v1478, %v1478
      %v1516 = vmul.f32 %v1479, %v1479
      %v1517 = vmul.f32 %v1480, %v1480
      %v1518 = vmul.f32 %v1481, %v1481
      %v1519 = vmul.f32 %v1482, %v1482
      %v1520 = vadd.f32 %v1512, %v1513
      %v1521 = vadd.f32 %v1520, %v1514
      %v1522 = vadd.f32 %v1521, %v1515
      %v1523 = vadd.f32 %v1522, %v1516
      %v1524 = vadd.f32 %v1523, %v1517
      %v1525 = vadd.f32 %v1524, %v1518
      %v1526 = vadd.f32 %v1525, %v1519
      %v1527 = vrot.slane %v1526, 4
      %v1528 = vadd.f32 %v1526, %v1527
      %v1529 = vrot.slane %v1528, 2
      %v1530 = vadd.f32 %v1528, %v1529
      %v1531 = vrot.slane %v1530, 1
      %v1532 = vadd.f32 %v1530, %v1531
      %vm1533 = vcmask 1040384
      %v1534 = vsel %vm1533, %v1511, %v1532
      %vm1535 = vcmask 1041408
      %v1536 = vsel %vm1535, %v1534, 0.0
      %1537 = vst [vmem:[%s181] sm:$0xff] %v1536
      %p1538 = scmp.lt.s32.totalorder %s15, 1
      %s1539 = scalar_select %p1538, %s15, 1
      %s1540 = smul.addr %s1539, 8
      %s1541 = smul.addr %s1540, 4
      %s1542 = scalar_lea.vmem %s2, %s1541
      %p1543 = scmp.lt.s32.totalorder %s15, 1
      %s1544 = scalar_select %p1543, %s15, 1
      %s1545 = smul.addr %s1544, 8
      %s1546 = scalar_lea.vmem %s3, %s1545
      // Predicated region
      $region29: #{down_forward.2} parent=27 // pred_check
        %p1547 = pneg %p80
      $region30: #{down_forward.2} parent=27 // pred_check_branch
        %1549 = sbr.rel (%p1547) target = $region32
      $region31: #{down_forward.2} parent=27 // pred_region
        _
      $region32: #{down_forward.2} parent=27 // pred_fallthru
        _
      // Predicated region
      $region33: #{down_forward.2} parent=27 // pred_check
        %p1550 = pneg %p106
      $region34: #{down_forward.2} parent=27 // pred_check_branch
        %1552 = sbr.rel (%p1550) target = $region36
      $region35: #{down_forward.2} parent=27 // pred_region
        _
      $region36: #{down_forward.2} parent=27 // pred_fallthru
        _
    $region28: #{down_forward.2} parent=5 // pred_fallthru
      _
    %p1553 = scmp.le.s32.totalorder 2, %s10
    // Predicated region
    $region37: #{down_forward.2} parent=5 // pred_check
      %p1554 = pneg %p1553
    $region38: #{down_forward.2} parent=5 // pred_check_branch
      %1556 = sbr.rel (%p1554) target = $region40
    $region39: #{down_forward.2} parent=5 // pred_region
      %s1557 = ssub.s32 %s10, 2
      // Predicated region
      $region41: #{down_forward.2} parent=39 // pred_check
        %p1558 = pneg %p86
      $region42: #{down_forward.2} parent=39 // pred_check_branch
        %1560 = sbr.rel (%p1558) target = $region44
      $region43: #{down_forward.2} parent=39 // pred_region
        %p1561 = scmp.lt.s32.totalorder %s16, 1
        %s1562 = scalar_select %p1561, %s16, 1
        %s1563 = smul.addr %s1562, 8
        %s1564 = smul.addr %s1563, 4
        %s1565 = scalar_lea.vmem %s2, %s1564
      $region44: #{down_forward.2} parent=39 // pred_fallthru
        _
      // Predicated region
      $region45: #{down_forward.2} parent=39 // pred_check
        %p1566 = pneg %p112
      $region46: #{down_forward.2} parent=39 // pred_check_branch
        %1568 = sbr.rel (%p1566) target = $region48
      $region47: #{down_forward.2} parent=39 // pred_region
        %p1569 = scmp.lt.s32.totalorder %s16, 1
        %s1570 = scalar_select %p1569, %s16, 1
        %s1571 = smul.addr %s1570, 8
        %s1572 = scalar_lea.vmem %s3, %s1571
      $region48: #{down_forward.2} parent=39 // pred_fallthru
        _
    $region40: #{down_forward.2} parent=5 // pred_fallthru
      _
  $region6: #{down_forward.2} parent=0 // loop_footer
    %s14 = sadd.s32 1, %s10
  $region7: #{down_forward.2} parent=0 // loop_footer_branch
    %9 = sbr.rel target = $region3
  $region8: #{down_forward.2} parent=0 // loop_exit
    _

// kernel: down_forward.3
$region0: #{down_forward.3}
  #allocation0 [shape = 'u32[]', space=smem, size = 0x4, offset = 0x4, fixed_abs, tag = 'smem constant byte address 0x4 - core index']
  #allocation1 [shape = 'u32[144,128]{1,0:T(1,128)}', space=vmem, size = 0x12000, scoped, tag = 'internal scratch']
  %s0 = inlined_call_operand.vmem [shape: bf16[2,8,8,128], index: 0, kind: input, shape index: {}]
  %s1 = inlined_call_operand.vmem [shape: f32[1,128], index: 1, kind: input, shape index: {}]
  %s2 = inlined_call_operand.vmem [shape: f32[1,128], index: 2, kind: input, shape index: {}]
  %s3 = inlined_call_operand.vmem [shape: bf16[1152,128], index: 3, kind: input, shape index: {}]
  %s4 = inlined_call_operand.vmem [shape: bf16[2,8,8,128], index: 4, kind: output, shape index: {0}]
  %s5 = inlined_call_operand.vmem [shape: f32[2,8,128], index: 5, kind: output, shape index: {1}]
  %6 = xla_tuple %s4, %s5
  %s7 = sld [smem:[#allocation0]]
  $region57: #{down_forward.3} parent=0
    _
  %s9 = ssub.s32 1, %s7
  %s10 = scalar_select 0, %s9, %s7
  loop: start=0, step=1, limit=4
  $region2: #{down_forward.3} parent=0 // loop_pre_header
    _
  $region3: #{down_forward.3} parent=0 // loop_header
    %s12 = sphi 0, %s16
    %p13 = scmp.ge.s32.totalorder %s12, 4
    %s22 = sphi 0, %s24
    %s25 = sphi 0, %s22
    %s26 = sphi 0, %s25
    %s42 = sphi 0, %s26
    %s46 = sphi 0, %s46
    %s48 = sphi 0, %s46
    %s49 = sphi 0, %s48
    %s63 = sphi 0, %s49
    %s67 = sphi 0, %s67
    %s69 = sphi 0, %s67
    %s70 = sphi 0, %s69
    %s84 = sphi 0, %s70
    %s88 = sphi 0, %s88
    %s90 = sphi 0, %s88
    %s91 = sphi 0, %s90
    %s105 = sphi 0, %s91
    %s111 = sphi 0, %s113
    %s114 = sphi 0, %s111
    %s115 = sphi 0, %s114
    %s131 = sphi 0, %s115
    %s137 = sphi 0, %s139
    %s140 = sphi 0, %s137
    %s141 = sphi 0, %s140
    %s157 = sphi 0, %s141
  $region4: #{down_forward.3} parent=0 // loop_header_branch
    %15 = sbr.rel (%p13) target = $region8
  $region5: #{down_forward.3} parent=0 // loop_body
    %s17 = ssub.s32 %s12, 1
    %s18 = ssub.s32 %s12, 2
    %s19 = sadd.s32 %s12, 1
    %s20 = ssub.s32 %s12, %s19
    %p21 = scmp.eq.s32.totalorder %s20, 0
    %s23 = sadd.s32 %s22, 1
    %s24 = scalar_select %p21, %s22, %s23
    %p27 = pneg %p21
    %p28 = scmp.eq.s32.totalorder %s12, 1
    %p29 = por %p27, %p28
    %p30 = scmp.ne.s32.totalorder %s22, %s25
    %p31 = scmp.eq.s32.totalorder %s12, 0
    %p32 = por %p30, %p31
    %p33 = scmp.ne.s32.totalorder %s22, %s25
    %p34 = scmp.eq.s32.totalorder %s17, 1
    %p35 = por %p33, %p34
    %p36 = scmp.ne.s32.totalorder %s25, %s26
    %p37 = scmp.eq.s32.totalorder %s17, 0
    %p38 = por %p36, %p37
    %p39 = scmp.ne.s32.totalorder %s25, %s26
    %p40 = scmp.eq.s32.totalorder %s18, 1
    %p41 = por %p39, %p40
    %p43 = scmp.ne.s32.totalorder %s26, %s42
    %p44 = scmp.eq.s32.totalorder %s18, 0
    %p45 = por %p43, %p44
    %s47 = sadd.s32 %s46, 1
    %p50 = scmp.eq.s32.totalorder %s12, 1
    %p51 = scmp.ne.s32.totalorder %s46, %s48
    %p52 = scmp.eq.s32.totalorder %s12, 0
    %p53 = por %p51, %p52
    %p54 = scmp.ne.s32.totalorder %s46, %s48
    %p55 = scmp.eq.s32.totalorder %s17, 1
    %p56 = por %p54, %p55
    %p57 = scmp.ne.s32.totalorder %s48, %s49
    %p58 = scmp.eq.s32.totalorder %s17, 0
    %p59 = por %p57, %p58
    %p60 = scmp.ne.s32.totalorder %s48, %s49
    %p61 = scmp.eq.s32.totalorder %s18, 1
    %p62 = por %p60, %p61
    %p64 = scmp.ne.s32.totalorder %s49, %s63
    %p65 = scmp.eq.s32.totalorder %s18, 0
    %p66 = por %p64, %p65
    %s68 = sadd.s32 %s67, 1
    %p71 = scmp.eq.s32.totalorder %s12, 1
    %p72 = scmp.ne.s32.totalorder %s67, %s69
    %p73 = scmp.eq.s32.totalorder %s12, 0
    %p74 = por %p72, %p73
    %p75 = scmp.ne.s32.totalorder %s67, %s69
    %p76 = scmp.eq.s32.totalorder %s17, 1
    %p77 = por %p75, %p76
    %p78 = scmp.ne.s32.totalorder %s69, %s70
    %p79 = scmp.eq.s32.totalorder %s17, 0
    %p80 = por %p78, %p79
    %p81 = scmp.ne.s32.totalorder %s69, %s70
    %p82 = scmp.eq.s32.totalorder %s18, 1
    %p83 = por %p81, %p82
    %p85 = scmp.ne.s32.totalorder %s70, %s84
    %p86 = scmp.eq.s32.totalorder %s18, 0
    %p87 = por %p85, %p86
    %s89 = sadd.s32 %s88, 1
    %p92 = scmp.eq.s32.totalorder %s12, 1
    %p93 = scmp.ne.s32.totalorder %s88, %s90
    %p94 = scmp.eq.s32.totalorder %s12, 0
    %p95 = por %p93, %p94
    %p96 = scmp.ne.s32.totalorder %s88, %s90
    %p97 = scmp.eq.s32.totalorder %s17, 1
    %p98 = por %p96, %p97
    %p99 = scmp.ne.s32.totalorder %s90, %s91
    %p100 = scmp.eq.s32.totalorder %s17, 0
    %p101 = por %p99, %p100
    %p102 = scmp.ne.s32.totalorder %s90, %s91
    %p103 = scmp.eq.s32.totalorder %s18, 1
    %p104 = por %p102, %p103
    %p106 = scmp.ne.s32.totalorder %s91, %s105
    %p107 = scmp.eq.s32.totalorder %s18, 0
    %p108 = por %p106, %p107
    %s109 = ssub.s32 %s12, %s19
    %p110 = scmp.eq.s32.totalorder %s109, 0
    %s112 = sadd.s32 %s111, 1
    %s113 = scalar_select %p110, %s111, %s112
    %p116 = pneg %p110
    %p117 = scmp.eq.s32.totalorder %s12, 1
    %p118 = por %p116, %p117
    %p119 = scmp.ne.s32.totalorder %s111, %s114
    %p120 = scmp.eq.s32.totalorder %s12, 0
    %p121 = por %p119, %p120
    %p122 = scmp.ne.s32.totalorder %s111, %s114
    %p123 = scmp.eq.s32.totalorder %s17, 1
    %p124 = por %p122, %p123
    %p125 = scmp.ne.s32.totalorder %s114, %s115
    %p126 = scmp.eq.s32.totalorder %s17, 0
    %p127 = por %p125, %p126
    %p128 = scmp.ne.s32.totalorder %s114, %s115
    %p129 = scmp.eq.s32.totalorder %s18, 1
    %p130 = por %p128, %p129
    %p132 = scmp.ne.s32.totalorder %s115, %s131
    %p133 = scmp.eq.s32.totalorder %s18, 0
    %p134 = por %p132, %p133
    %s135 = ssub.s32 %s12, %s19
    %p136 = scmp.eq.s32.totalorder %s135, 0
    %s138 = sadd.s32 %s137, 1
    %s139 = scalar_select %p136, %s137, %s138
    %p142 = pneg %p136
    %p143 = scmp.eq.s32.totalorder %s12, 1
    %p144 = por %p142, %p143
    %p145 = scmp.ne.s32.totalorder %s137, %s140
    %p146 = scmp.eq.s32.totalorder %s12, 0
    %p147 = por %p145, %p146
    %p148 = scmp.ne.s32.totalorder %s137, %s140
    %p149 = scmp.eq.s32.totalorder %s17, 1
    %p150 = por %p148, %p149
    %p151 = scmp.ne.s32.totalorder %s140, %s141
    %p152 = scmp.eq.s32.totalorder %s17, 0
    %p153 = por %p151, %p152
    %p154 = scmp.ne.s32.totalorder %s140, %s141
    %p155 = scmp.eq.s32.totalorder %s18, 1
    %p156 = por %p154, %p155
    %p158 = scmp.ne.s32.totalorder %s141, %s157
    %p159 = scmp.eq.s32.totalorder %s18, 0
    %p160 = por %p158, %p159
    %p161 = scmp.le.s32.totalorder 1, %s12
    %p162 = scmp.lt.s32.totalorder %s12, 3
    %p163 = pnand %p161, %p162
    %p164 = pneg %p163
    // Predicated region
    $region9: #{down_forward.3} parent=5 // pred_check
      _
    $region10: #{down_forward.3} parent=5 // pred_check_branch
      %166 = sbr.rel (%p163) target = $region12
    $region11: #{down_forward.3} parent=5 // pred_region
      %s167 = ssub.s32 %s12, 1
      // Predicated region
      $region13: #{down_forward.3} parent=11 // pred_check
        %p168 = pneg %p59
      $region14: #{down_forward.3} parent=11 // pred_check_branch
        %170 = sbr.rel (%p168) target = $region16
      $region15: #{down_forward.3} parent=11 // pred_region
        _
      $region16: #{down_forward.3} parent=11 // pred_fallthru
        _
      // Predicated region
      $region17: #{down_forward.3} parent=11 // pred_check
        %p171 = pneg %p80
      $region18: #{down_forward.3} parent=11 // pred_check_branch
        %173 = sbr.rel (%p171) target = $region20
      $region19: #{down_forward.3} parent=11 // pred_region
        _
      $region20: #{down_forward.3} parent=11 // pred_fallthru
        _
      // Predicated region
      $region21: #{down_forward.3} parent=11 // pred_check
        %p174 = pneg %p101
      $region22: #{down_forward.3} parent=11 // pred_check_branch
        %176 = sbr.rel (%p174) target = $region24
      $region23: #{down_forward.3} parent=11 // pred_region
        _
      $region24: #{down_forward.3} parent=11 // pred_fallthru
        _
    $region12: #{down_forward.3} parent=5 // pred_fallthru
      _
    %p177 = scmp.lt.s32.totalorder %s12, 2
    // Predicated region
    $region25: #{down_forward.3} parent=5 // pred_check
      %p178 = pneg %p177
    $region26: #{down_forward.3} parent=5 // pred_check_branch
      %180 = sbr.rel (%p178) target = $region28
    $region27: #{down_forward.3} parent=5 // pred_region
      // Predicated region
      $region29: #{down_forward.3} parent=27 // pred_check
        %p181 = pneg %p32
      $region30: #{down_forward.3} parent=27 // pred_check_branch
        %183 = sbr.rel (%p181) target = $region32
      $region31: #{down_forward.3} parent=27 // pred_region
        %p184 = scmp.lt.s32.totalorder %s12, 1
        %s185 = scalar_select %p184, %s12, 1
        %s186 = smul.addr %s185, 8
        %s187 = smul.addr %s186, 4
        %s188 = scalar_lea.vmem %s0, %s187
      $region32: #{down_forward.3} parent=27 // pred_fallthru
        _
    $region28: #{down_forward.3} parent=5 // pred_fallthru
      _
    %p189 = scmp.le.s32.totalorder 1, %s12
    %p190 = scmp.lt.s32.totalorder %s12, 3
    %p191 = pnand %p189, %p190
    %p192 = pneg %p191
    // Predicated region
    $region33: #{down_forward.3} parent=5 // pred_check
      _
    $region34: #{down_forward.3} parent=5 // pred_check_branch
      %194 = sbr.rel (%p191) target = $region36
    $region35: #{down_forward.3} parent=5 // pred_region
      %s195 = ssub.s32 %s12, 1
      %p196 = scmp.lt.s32.totalorder %s17, 1
      %s197 = scalar_select %p196, %s17, 1
      %s198 = smul.addr %s197, 8
      %s199 = smul.addr %s198, 4
      %s200 = scalar_lea.vmem %s0, %s199
      %p201 = pneg %p38
      %p202 = pneg %p35
      %p203 = pneg %p59
      %p204 = pneg %p56
      %p205 = pneg %p80
      %p206 = pneg %p77
      %p207 = pneg %p101
      %p208 = pneg %p98
      %p209 = pneg %p127
      %p210 = pneg %p124
      %p211 = scmp.lt.s32.totalorder %s17, 1
      %s212 = scalar_select %p211, %s17, 1
      %s213 = smul.addr %s212, 8
      %s214 = smul.addr %s213, 4
      %s215 = scalar_lea.vmem %s4, %s214
      %p216 = pneg %p153
      %p217 = pneg %p150
      %p218 = scmp.lt.s32.totalorder %s17, 1
      %s219 = scalar_select %p218, %s17, 1
      %s220 = smul.addr %s219, 8
      %s221 = scalar_lea.vmem %s5, %s220
      %p222 = scmp.lt.s32.totalorder %s17, 1
      %s223 = scalar_select %p222, %s17, 1
      %s224 = smul.addr %s223, 8
      %s225 = smul.addr %s224, 4
      %s226 = scalar_lea.vmem %s0, %s225
      %p227 = scmp.lt.s32.totalorder %s17, 1
      %s228 = scalar_select %p227, %s17, 1
      %s229 = smul.addr %s228, 8
      %s230 = smul.addr %s229, 4
      %s231 = scalar_lea.vmem %s4, %s230
      %p232 = scmp.lt.s32.totalorder %s17, 1
      %s233 = scalar_select %p232, %s17, 1
      %s234 = smul.addr %s233, 8
      %s235 = scalar_lea.vmem %s5, %s234
      %v237 = vld [vmem:[%s226] sm:$0xf]
      %v238 = vld [vmem:[%s226 + $0x4] sm:$0xf]
      %v239 = vld [vmem:[%s226 + $0x8] sm:$0xf]
      %v240 = vld [vmem:[%s226 + $0xc] sm:$0xf]
      %v241 = vld [vmem:[%s226 + $0x10] sm:$0xf]
      %v242 = vld [vmem:[%s226 + $0x14] sm:$0xf]
      %v243 = vld [vmem:[%s226 + $0x18] sm:$0xf]
      %v244 = vld [vmem:[%s226 + $0x1c] sm:$0xf]
      %v245 = vunpack.c.l.bf16 %v237
      %v246 = vunpack.c.l.bf16 %v238
      %v247 = vunpack.c.l.bf16 %v239
      %v248 = vunpack.c.l.bf16 %v240
      %v249 = vunpack.c.l.bf16 %v241
      %v250 = vunpack.c.l.bf16 %v242
      %v251 = vunpack.c.l.bf16 %v243
      %v252 = vunpack.c.l.bf16 %v244
      %v253 = vld [vmem:[%s1] sm:$0x1]
      %v255 = vlaneseq
      %v256 = vshrl.u32 %v255, 7
      %v257 = vsub.s32 0, %v256
      %v258 = vrot.slane %v253, %v257
      %v260 = vmul.f32 %v245, %v258
      %v261 = vmul.f32 %v246, %v258
      %v262 = vmul.f32 %v247, %v258
      %v263 = vmul.f32 %v248, %v258
      %v264 = vmul.f32 %v249, %v258
      %v265 = vmul.f32 %v250, %v258
      %v266 = vmul.f32 %v251, %v258
      %v267 = vmul.f32 %v252, %v258
      %v268 = vld [vmem:[%s2] sm:$0x1]
      %v270 = vlaneseq
      %v271 = vshrl.u32 %v270, 7
      %v272 = vsub.s32 0, %v271
      %v273 = vrot.slane %v268, %v272
      %v275 = vadd.f32 %v260, %v273
      %v276 = vadd.f32 %v261, %v273
      %v277 = vadd.f32 %v262, %v273
      %v278 = vadd.f32 %v263, %v273
      %v279 = vadd.f32 %v264, %v273
      %v280 = vadd.f32 %v265, %v273
      %v281 = vadd.f32 %v266, %v273
      %v282 = vadd.f32 %v267, %v273
      %v283 = vmax.f32 %v275, 0.0
      %v284 = vmax.f32 %v276, 0.0
      %v285 = vmax.f32 %v277, 0.0
      %v286 = vmax.f32 %v278, 0.0
      %v287 = vmax.f32 %v279, 0.0
      %v288 = vmax.f32 %v280, 0.0
      %v289 = vmax.f32 %v281, 0.0
      %v290 = vmax.f32 %v282, 0.0
      %v291 = vpack.c.bf16 %v283, %v283
      %v292 = vpack.c.bf16 %v284, %v284
      %v293 = vpack.c.bf16 %v285, %v285
      %v294 = vpack.c.bf16 %v286, %v286
      %v295 = vpack.c.bf16 %v287, %v287
      %v296 = vpack.c.bf16 %v288, %v288
      %v297 = vpack.c.bf16 %v289, %v289
      %v298 = vpack.c.bf16 %v290, %v290
      %v300 = vshrl.u32 0, 16
      %v302 = vrot.slane %v300, 7
      %v303 = vshll.u32 0, 16
      %v305 = vor.u32 %v302, %v303
      %v307 = vshrl.u32 %v291, 16
      %v309 = vrot.slane %v307, 7
      %v310 = vshll.u32 %v291, 16
      %v312 = vor.u32 %v309, %v310
      %v314 = vshrl.u32 %v292, 16
      %v316 = vrot.slane %v314, 7
      %v317 = vshll.u32 %v292, 16
      %v319 = vor.u32 %v316, %v317
      %v321 = vshrl.u32 %v293, 16
      %v323 = vrot.slane %v321, 7
      %v324 = vshll.u32 %v293, 16
      %v326 = vor.u32 %v323, %v324
      %v328 = vshrl.u32 %v294, 16
      %v330 = vrot.slane %v328, 7
      %v331 = vshll.u32 %v294, 16
      %v333 = vor.u32 %v330, %v331
      %v335 = vshrl.u32 %v295, 16
      %v337 = vrot.slane %v335, 7
      %v338 = vshll.u32 %v295, 16
      %v340 = vor.u32 %v337, %v338
      %v342 = vshrl.u32 %v296, 16
      %v344 = vrot.slane %v342, 7
      %v345 = vshll.u32 %v296, 16
      %v347 = vor.u32 %v344, %v345
      %v349 = vshrl.u32 %v297, 16
      %v351 = vrot.slane %v349, 7
      %v352 = vshll.u32 %v297, 16
      %v354 = vor.u32 %v351, %v352
      %vm363 = vcmask 1040384
      %vm364 = vsmask.f32 256
      %vm365 = vmand %vm363, %vm364
      %v366 = vsel %vm365, 0, %v305
      %v367 = vsel %vm365, 0, %v312
      %v368 = vsel %vm365, 0, %v319
      %v369 = vsel %vm365, 0, %v326
      %v370 = vsel %vm365, 0, %v333
      %v371 = vsel %vm365, 0, %v340
      %v372 = vsel %vm365, 0, %v347
      %v373 = vsel %vm365, 0, %v354
      %v374 = vrot.slane %v303, 1
      %v375 = vor.u32 %v300, %v374
      %v376 = vrot.slane %v310, 1
      %v377 = vor.u32 %v307, %v376
      %v378 = vrot.slane %v317, 1
      %v379 = vor.u32 %v314, %v378
      %v380 = vrot.slane %v324, 1
      %v381 = vor.u32 %v321, %v380
      %v382 = vrot.slane %v331, 1
      %v383 = vor.u32 %v328, %v382
      %v384 = vrot.slane %v338, 1
      %v385 = vor.u32 %v335, %v384
      %v386 = vrot.slane %v345, 1
      %v387 = vor.u32 %v342, %v386
      %v388 = vrot.slane %v352, 1
      %v389 = vor.u32 %v349, %v388
      %vm398 = vcmask 1043456
      %vm399 = vsmask.f32 3328
      %vm400 = vmand %vm398, %vm399
      %v401 = vsel %vm400, %v375, 0
      %v402 = vsel %vm400, %v377, 0
      %v403 = vsel %vm400, %v379, 0
      %v404 = vsel %vm400, %v381, 0
      %v405 = vsel %vm400, %v383, 0
      %v406 = vsel %vm400, %v385, 0
      %v407 = vsel %vm400, %v387, 0
      %v408 = vsel %vm400, %v389, 0
      %v433 = vunpack.c.l.b16 %v366
      %v434 = vunpack.c.l.b16 0
      %v435 = vunpack.c.l.b16 %v401
      %v436 = vunpack.c.l.b16 %v367
      %v437 = vunpack.c.l.b16 %v291
      %v438 = vunpack.c.l.b16 %v402
      %v439 = vunpack.c.l.b16 %v368
      %v440 = vunpack.c.l.b16 %v292
      %v441 = vunpack.c.l.b16 %v403
      %v442 = vunpack.c.l.b16 %v369
      %v443 = vunpack.c.l.b16 %v293
      %v444 = vunpack.c.l.b16 %v404
      %v445 = vunpack.c.l.b16 %v370
      %v446 = vunpack.c.l.b16 %v294
      %v447 = vunpack.c.l.b16 %v405
      %v448 = vunpack.c.l.b16 %v371
      %v449 = vunpack.c.l.b16 %v295
      %v450 = vunpack.c.l.b16 %v406
      %v451 = vunpack.c.l.b16 %v372
      %v452 = vunpack.c.l.b16 %v296
      %v453 = vunpack.c.l.b16 %v407
      %v454 = vunpack.c.l.b16 %v373
      %v455 = vunpack.c.l.b16 %v297
      %v456 = vunpack.c.l.b16 %v408
      %v457 = vld [vmem:[%s3] sm:$0xf]
      %v458 = vld [vmem:[%s3 + $0x4] sm:$0xf]
      %v459 = vld [vmem:[%s3 + $0x8] sm:$0xf]
      %v460 = vld [vmem:[%s3 + $0xc] sm:$0xf]
      %v461 = vld [vmem:[%s3 + $0x10] sm:$0xf]
      %v462 = vld [vmem:[%s3 + $0x14] sm:$0xf]
      %v463 = vld [vmem:[%s3 + $0x18] sm:$0xf]
      %v464 = vld [vmem:[%s3 + $0x1c] sm:$0xf]
      %v465 = vld [vmem:[%s3 + $0x20] sm:$0xf]
      %v466 = vld [vmem:[%s3 + $0x24] sm:$0xf]
      %v467 = vld [vmem:[%s3 + $0x28] sm:$0xf]
      %v468 = vld [vmem:[%s3 + $0x2c] sm:$0xf]
      %v469 = vld [vmem:[%s3 + $0x30] sm:$0xf]
      %v470 = vld [vmem:[%s3 + $0x34] sm:$0xf]
      %v471 = vld [vmem:[%s3 + $0x38] sm:$0xf]
      %v472 = vld [vmem:[%s3 + $0x3c] sm:$0xf]
      %v473 = vld [vmem:[%s3 + $0x40] sm:$0xf]
      %v474 = vld [vmem:[%s3 + $0x44] sm:$0xf]
      %v475 = vld [vmem:[%s3 + $0x48] sm:$0xf]
      %v476 = vld [vmem:[%s3 + $0x4c] sm:$0xf]
      %v477 = vld [vmem:[%s3 + $0x50] sm:$0xf]
      %v478 = vld [vmem:[%s3 + $0x54] sm:$0xf]
      %v479 = vld [vmem:[%s3 + $0x58] sm:$0xf]
      %v480 = vld [vmem:[%s3 + $0x5c] sm:$0xf]
      %v481 = vld [vmem:[%s3 + $0x60] sm:$0xf]
      %v482 = vld [vmem:[%s3 + $0x64] sm:$0xf]
      %v483 = vld [vmem:[%s3 + $0x68] sm:$0xf]
      %v484 = vld [vmem:[%s3 + $0x6c] sm:$0xf]
      %v485 = vld [vmem:[%s3 + $0x70] sm:$0xf]
      %v486 = vld [vmem:[%s3 + $0x74] sm:$0xf]
      %v487 = vld [vmem:[%s3 + $0x78] sm:$0xf]
      %v488 = vld [vmem:[%s3 + $0x7c] sm:$0xf]
      %v489 = vld [vmem:[%s3 + $0x80] sm:$0xf]
      %v490 = vld [vmem:[%s3 + $0x84] sm:$0xf]
      %v491 = vld [vmem:[%s3 + $0x88] sm:$0xf]
      %v492 = vld [vmem:[%s3 + $0x8c] sm:$0xf]
      %v493 = vld [vmem:[%s3 + $0x90] sm:$0xf]
      %v494 = vld [vmem:[%s3 + $0x94] sm:$0xf]
      %v495 = vld [vmem:[%s3 + $0x98] sm:$0xf]
      %v496 = vld [vmem:[%s3 + $0x9c] sm:$0xf]
      %v497 = vld [vmem:[%s3 + $0xa0] sm:$0xf]
      %v498 = vld [vmem:[%s3 + $0xa4] sm:$0xf]
      %v499 = vld [vmem:[%s3 + $0xa8] sm:$0xf]
      %v500 = vld [vmem:[%s3 + $0xac] sm:$0xf]
      %v501 = vld [vmem:[%s3 + $0xb0] sm:$0xf]
      %v502 = vld [vmem:[%s3 + $0xb4] sm:$0xf]
      %v503 = vld [vmem:[%s3 + $0xb8] sm:$0xf]
      %v504 = vld [vmem:[%s3 + $0xbc] sm:$0xf]
      %v506 = vshrl.u32 %v298, 16
      %v508 = vrot.slane %v506, 7
      %v509 = vshll.u32 %v298, 16
      %v511 = vor.u32 %v508, %v509
      %v513 = vsel %vm365, 0, %v511
      %v514 = vrot.slane %v509, 1
      %v515 = vor.u32 %v506, %v514
      %v517 = vsel %vm400, %v515, 0
      %v521 = vunpack.c.l.b16 %v513
      %v522 = vunpack.c.l.b16 %v298
      %v523 = vunpack.c.l.b16 %v517
      %v524 = vld [vmem:[%s3 + $0xc0] sm:$0xf]
      %v525 = vld [vmem:[%s3 + $0xc4] sm:$0xf]
      %v526 = vld [vmem:[%s3 + $0xc8] sm:$0xf]
      %v527 = vld [vmem:[%s3 + $0xcc] sm:$0xf]
      %v528 = vld [vmem:[%s3 + $0xd0] sm:$0xf]
      %v529 = vld [vmem:[%s3 + $0xd4] sm:$0xf]
      %v530 = vld [vmem:[%s3 + $0xd8] sm:$0xf]
      %v531 = vld [vmem:[%s3 + $0xdc] sm:$0xf]
      %v532 = vld [vmem:[%s3 + $0xe0] sm:$0xf]
      %v533 = vld [vmem:[%s3 + $0xe4] sm:$0xf]
      %v534 = vld [vmem:[%s3 + $0xe8] sm:$0xf]
      %v535 = vld [vmem:[%s3 + $0xec] sm:$0xf]
      %v536 = vld [vmem:[%s3 + $0xf0] sm:$0xf]
      %v537 = vld [vmem:[%s3 + $0xf4] sm:$0xf]
      %v538 = vld [vmem:[%s3 + $0xf8] sm:$0xf]
      %v539 = vld [vmem:[%s3 + $0xfc] sm:$0xf]
      %v540 = vld [vmem:[%s3 + $0x100] sm:$0xf]
      %v541 = vld [vmem:[%s3 + $0x104] sm:$0xf]
      %v542 = vld [vmem:[%s3 + $0x108] sm:$0xf]
      %v543 = vld [vmem:[%s3 + $0x10c] sm:$0xf]
      %v544 = vld [vmem:[%s3 + $0x110] sm:$0xf]
      %v545 = vld [vmem:[%s3 + $0x114] sm:$0xf]
      %v546 = vld [vmem:[%s3 + $0x118] sm:$0xf]
      %v547 = vld [vmem:[%s3 + $0x11c] sm:$0xf]
      %v548 = vld [vmem:[%s3 + $0x120] sm:$0xf]
      %v549 = vld [vmem:[%s3 + $0x124] sm:$0xf]
      %v550 = vld [vmem:[%s3 + $0x128] sm:$0xf]
      %v551 = vld [vmem:[%s3 + $0x12c] sm:$0xf]
      %v552 = vld [vmem:[%s3 + $0x130] sm:$0xf]
      %v553 = vld [vmem:[%s3 + $0x134] sm:$0xf]
      %v554 = vld [vmem:[%s3 + $0x138] sm:$0xf]
      %v555 = vld [vmem:[%s3 + $0x13c] sm:$0xf]
      %v556 = vld [vmem:[%s3 + $0x140] sm:$0xf]
      %v557 = vld [vmem:[%s3 + $0x144] sm:$0xf]
      %v558 = vld [vmem:[%s3 + $0x148] sm:$0xf]
      %v559 = vld [vmem:[%s3 + $0x14c] sm:$0xf]
      %v560 = vld [vmem:[%s3 + $0x150] sm:$0xf]
      %v561 = vld [vmem:[%s3 + $0x154] sm:$0xf]
      %v562 = vld [vmem:[%s3 + $0x158] sm:$0xf]
      %v563 = vld [vmem:[%s3 + $0x15c] sm:$0xf]
      %v564 = vld [vmem:[%s3 + $0x160] sm:$0xf]
      %v565 = vld [vmem:[%s3 + $0x164] sm:$0xf]
      %v566 = vld [vmem:[%s3 + $0x168] sm:$0xf]
      %v567 = vld [vmem:[%s3 + $0x16c] sm:$0xf]
      %v568 = vld [vmem:[%s3 + $0x170] sm:$0xf]
      %v569 = vld [vmem:[%s3 + $0x174] sm:$0xf]
      %v570 = vld [vmem:[%s3 + $0x178] sm:$0xf]
      %v571 = vld [vmem:[%s3 + $0x17c] sm:$0xf]
      %v572 = vpack.c.b16 %v439, %v436
      %v573 = vpack.c.b16 %v440, %v437
      %v574 = vpack.c.b16 %v441, %v438
      %v575 = vpack.c.b16 %v445, %v442
      %v576 = vpack.c.b16 %v446, %v443
      %v577 = vpack.c.b16 %v447, %v444
      %v578 = vpack.c.b16 %v451, %v448
      %v579 = vpack.c.b16 %v452, %v449
      %v580 = vpack.c.b16 %v453, %v450
      %v581 = vpack.c.b16 %v521, %v454
      %v582 = vpack.c.b16 %v522, %v455
      %v583 = vpack.c.b16 %v523, %v456
      %v644 = vunpack.c.l.b16 %v524
      %v645 = vunpack.c.l.b16 %v525
      %v646 = vunpack.c.l.b16 %v526
      %v647 = vunpack.c.l.b16 %v527
      %v648 = vunpack.c.l.b16 %v528
      %v649 = vunpack.c.l.b16 %v529
      %v650 = vunpack.c.l.b16 %v530
      %v651 = vunpack.c.l.b16 %v531
      %v652 = vunpack.c.l.b16 %v532
      %v653 = vunpack.c.l.b16 %v533
      %v654 = vunpack.c.l.b16 %v534
      %v655 = vunpack.c.l.b16 %v535
      %v656 = vunpack.c.l.b16 %v536
      %v657 = vunpack.c.l.b16 %v537
      %v658 = vunpack.c.l.b16 %v538
      %v659 = vunpack.c.l.b16 %v539
      %v660 = vunpack.c.l.b16 %v540
      %v661 = vunpack.c.l.b16 %v541
      %v662 = vunpack.c.l.b16 %v542
      %v663 = vunpack.c.l.b16 %v543
      %v664 = vunpack.c.l.b16 %v544
      %v665 = vunpack.c.l.b16 %v545
      %v666 = vunpack.c.l.b16 %v546
      %v667 = vunpack.c.l.b16 %v547
      %v668 = vunpack.c.l.b16 %v548
      %v669 = vunpack.c.l.b16 %v549
      %v670 = vunpack.c.l.b16 %v550
      %v671 = vunpack.c.l.b16 %v551
      %v672 = vunpack.c.l.b16 %v552
      %v673 = vunpack.c.l.b16 %v553
      %v674 = vunpack.c.l.b16 %v554
      %v675 = vunpack.c.l.b16 %v555
      %v676 = vunpack.c.l.b16 %v556
      %v677 = vunpack.c.l.b16 %v557
      %v678 = vunpack.c.l.b16 %v558
      %v679 = vunpack.c.l.b16 %v559
      %v680 = vunpack.c.l.b16 %v560
      %v681 = vunpack.c.l.b16 %v561
      %v682 = vunpack.c.l.b16 %v562
      %v683 = vunpack.c.l.b16 %v563
      %v684 = vunpack.c.l.b16 %v564
      %v685 = vunpack.c.l.b16 %v565
      %v686 = vunpack.c.l.b16 %v566
      %v687 = vunpack.c.l.b16 %v567
      %v688 = vunpack.c.l.b16 %v568
      %v689 = vunpack.c.l.b16 %v569
      %v690 = vunpack.c.l.b16 %v570
      %v691 = vunpack.c.l.b16 %v571
      %v692 = vpack.c.b16 %v645, %v644
      %v693 = vpack.c.b16 %v647, %v646
      %v694 = vpack.c.b16 %v649, %v648
      %v695 = vpack.c.b16 %v651, %v650
      %v696 = vpack.c.b16 %v653, %v652
      %v697 = vpack.c.b16 %v655, %v654
      %v698 = vpack.c.b16 %v657, %v656
      %v699 = vpack.c.b16 %v659, %v658
      %v700 = vpack.c.b16 %v661, %v660
      %v701 = vpack.c.b16 %v663, %v662
      %v702 = vpack.c.b16 %v665, %v664
      %v703 = vpack.c.b16 %v667, %v666
      %v704 = vpack.c.b16 %v669, %v668
      %v705 = vpack.c.b16 %v671, %v670
      %v706 = vpack.c.b16 %v673, %v672
      %v707 = vpack.c.b16 %v675, %v674
      %v708 = vpack.c.b16 %v677, %v676
      %v709 = vpack.c.b16 %v679, %v678
      %v710 = vpack.c.b16 %v681, %v680
      %v711 = vpack.c.b16 %v683, %v682
      %v712 = vpack.c.b16 %v685, %v684
      %v713 = vpack.c.b16 %v687, %v686
      %v714 = vpack.c.b16 %v689, %v688
      %v715 = vpack.c.b16 %v691, %v690
      %740 = vmatprep.subr.bf16.mxu0 0
      %741 = vmatpush1.bf16.msra.mxu0 %v699
      %742 = vmatprep.subr.bf16.mxu0 0
      %743 = vmatpush1.bf16.msra.mxu0 %v698
      %744 = vmatprep.subr.bf16.mxu0 0
      %745 = vmatpush1.bf16.msra.mxu0 %v697
      %746 = vmatprep.subr.bf16.mxu0 0
      %747 = vmatpush1.bf16.msra.mxu0 %v696
      %748 = vmatprep.subr.bf16.mxu0 0
      %749 = vmatpush1.bf16.msra.mxu0 %v695
      %750 = vmatprep.subr.bf16.mxu0 0
      %751 = vmatpush1.bf16.msra.mxu0 %v694
      %752 = vmatprep.subr.bf16.mxu0 0
      %753 = vmatpush1.bf16.msra.mxu0 %v693
      %754 = vmatprep.subr.bf16.mxu0 0
      %755 = vmatpush1.bf16.msra.mxu0 %v692
      %756 = vmatprep.subr.bf16.mxu0 0
      %757 = vmatpush2.bf16.msra.mxu0 %v707
      %758 = vmatprep.subr.bf16.mxu0 0
      %759 = vmatpush2.bf16.msra.mxu0 %v706
      %760 = vmatprep.subr.bf16.mxu0 0
      %761 = vmatpush2.bf16.msra.mxu0 %v705
      %762 = vmatprep.subr.bf16.mxu0 0
      %763 = vmatpush2.bf16.msra.mxu0 %v704
      %764 = vmatprep.subr.bf16.mxu0 0
      %765 = vmatpush2.bf16.msra.mxu0 %v703
      %766 = vmatprep.subr.bf16.mxu0 0
      %767 = vmatpush2.bf16.msra.mxu0 %v702
      %768 = vmatprep.subr.bf16.mxu0 0
      %769 = vmatpush2.bf16.msra.mxu0 %v701
      %770 = vmatprep.subr.bf16.mxu0 0
      %771 = vmatpush2.bf16.msra.mxu0 %v700
      %772 = vmatprep.mubr.bf16.mxu0 %v573
      %773 = vmatmul.mubr.bf16.gmra.mxu0 %v572
      %v774 = vpop.f32.mrf.mxu0
      %v775 = vadd.f32 0.0, %v774
      %v776 = vpop.f32.mrf.mxu0
      %v777 = vpop.f32.mrf.mxu0
      %v778 = vadd.f32 0.0, %v777
      %v779 = vpop.f32.mrf.mxu0
      %780 = vmatprep.mubr.bf16.mxu0 %v576
      %781 = vmatmul.mubr.bf16.gmra.mxu0 %v575
      %v782 = vpop.f32.mrf.mxu0
      %v783 = vadd.f32 0.0, %v782
      %v784 = vpop.f32.mrf.mxu0
      %v785 = vpop.f32.mrf.mxu0
      %v786 = vadd.f32 0.0, %v785
      %v787 = vpop.f32.mrf.mxu0
      %788 = vmatprep.mubr.bf16.mxu0 %v579
      %789 = vmatmul.mubr.bf16.gmra.mxu0 %v578
      %v790 = vpop.f32.mrf.mxu0
      %v791 = vadd.f32 0.0, %v790
      %v792 = vpop.f32.mrf.mxu0
      %v793 = vpop.f32.mrf.mxu0
      %v794 = vadd.f32 0.0, %v793
      %v795 = vpop.f32.mrf.mxu0
      %796 = vmatprep.mubr.bf16.mxu0 %v582
      %797 = vmatmul.mubr.bf16.gmra.mxu0 %v581
      %v798 = vpop.f32.mrf.mxu0
      %v799 = vadd.f32 0.0, %v798
      %v800 = vpop.f32.mrf.mxu0
      %v801 = vpop.f32.mrf.mxu0
      %v802 = vadd.f32 0.0, %v801
      %v803 = vpop.f32.mrf.mxu0
      %804 = vdwg.mxu0
      %805 = vmatprep.subr.bf16.mxu0 0
      %806 = vmatpush1.bf16.msra.mxu0 %v715
      %807 = vmatprep.subr.bf16.mxu0 0
      %808 = vmatpush1.bf16.msra.mxu0 %v714
      %809 = vmatprep.subr.bf16.mxu0 0
      %810 = vmatpush1.bf16.msra.mxu0 %v713
      %811 = vmatprep.subr.bf16.mxu0 0
      %812 = vmatpush1.bf16.msra.mxu0 %v712
      %813 = vmatprep.subr.bf16.mxu0 0
      %814 = vmatpush1.bf16.msra.mxu0 %v711
      %815 = vmatprep.subr.bf16.mxu0 0
      %816 = vmatpush1.bf16.msra.mxu0 %v710
      %817 = vmatprep.subr.bf16.mxu0 0
      %818 = vmatpush1.bf16.msra.mxu0 %v709
      %819 = vmatprep.subr.bf16.mxu0 0
      %820 = vmatpush1.bf16.msra.mxu0 %v708
      %821 = vmatprep.subr.bf16.mxu0 0
      %822 = vmatpush2.bf16.msra.mxu0 0
      %823 = vmatprep.subr.bf16.mxu0 0
      %824 = vmatpush2.bf16.msra.mxu0 0
      %825 = vmatprep.subr.bf16.mxu0 0
      %826 = vmatpush2.bf16.msra.mxu0 0
      %827 = vmatprep.subr.bf16.mxu0 0
      %828 = vmatpush2.bf16.msra.mxu0 0
      %829 = vmatprep.subr.bf16.mxu0 0
      %830 = vmatpush2.bf16.msra.mxu0 0
      %831 = vmatprep.subr.bf16.mxu0 0
      %832 = vmatpush2.bf16.msra.mxu0 0
      %833 = vmatprep.subr.bf16.mxu0 0
      %834 = vmatpush2.bf16.msra.mxu0 0
      %835 = vmatprep.subr.bf16.mxu0 0
      %836 = vmatpush2.bf16.msra.mxu0 0
      %837 = vmatprep.mubr.bf16.mxu0 0
      %838 = vmatmul.mubr.bf16.gmra.mxu0 %v574
      %v839 = vpop.f32.mrf.mxu0
      %v840 = vadd.f32 %v775, %v839
      %v841 = vpop.f32.mrf.mxu0
      %v842 = vpop.f32.mrf.mxu0
      %v843 = vadd.f32 %v778, %v842
      %v844 = vpop.f32.mrf.mxu0
      %845 = vmatprep.mubr.bf16.mxu0 0
      %846 = vmatmul.mubr.bf16.gmra.mxu0 %v577
      %v847 = vpop.f32.mrf.mxu0
      %v848 = vadd.f32 %v783, %v847
      %v849 = vpop.f32.mrf.mxu0
      %v850 = vpop.f32.mrf.mxu0
      %v851 = vadd.f32 %v786, %v850
      %v852 = vpop.f32.mrf.mxu0
      %853 = vmatprep.mubr.bf16.mxu0 0
      %854 = vmatmul.mubr.bf16.gmra.mxu0 %v580
      %v855 = vpop.f32.mrf.mxu0
      %v856 = vadd.f32 %v791, %v855
      %v857 = vpop.f32.mrf.mxu0
      %v858 = vpop.f32.mrf.mxu0
      %v859 = vadd.f32 %v794, %v858
      %v860 = vpop.f32.mrf.mxu0
      %861 = vmatprep.mubr.bf16.mxu0 0
      %862 = vmatmul.mubr.bf16.gmra.mxu0 %v583
      %v863 = vpop.f32.mrf.mxu0
      %v864 = vadd.f32 %v799, %v863
      %v865 = vpop.f32.mrf.mxu0
      %v866 = vpop.f32.mrf.mxu0
      %v867 = vadd.f32 %v802, %v866
      %v868 = vpop.f32.mrf.mxu0
      %869 = vdwg.mxu0
      %v870 = vpack.c.b16 %v436, %v433
      %v871 = vpack.c.b16 %v437, %v434
      %v872 = vpack.c.b16 %v438, %v435
      %v873 = vpack.c.b16 %v442, %v439
      %v874 = vpack.c.b16 %v443, %v440
      %v875 = vpack.c.b16 %v444, %v441
      %v876 = vpack.c.b16 %v448, %v445
      %v877 = vpack.c.b16 %v449, %v446
      %v878 = vpack.c.b16 %v450, %v447
      %v879 = vpack.c.b16 %v454, %v451
      %v880 = vpack.c.b16 %v455, %v452
      %v881 = vpack.c.b16 %v456, %v453
      %v942 = vunpack.c.l.b16 %v457
      %v943 = vunpack.c.l.b16 %v458
      %v944 = vunpack.c.l.b16 %v459
      %v945 = vunpack.c.l.b16 %v460
      %v946 = vunpack.c.l.b16 %v461
      %v947 = vunpack.c.l.b16 %v462
      %v948 = vunpack.c.l.b16 %v463
      %v949 = vunpack.c.l.b16 %v464
      %v950 = vunpack.c.l.b16 %v465
      %v951 = vunpack.c.l.b16 %v466
      %v952 = vunpack.c.l.b16 %v467
      %v953 = vunpack.c.l.b16 %v468
      %v954 = vunpack.c.l.b16 %v469
      %v955 = vunpack.c.l.b16 %v470
      %v956 = vunpack.c.l.b16 %v471
      %v957 = vunpack.c.l.b16 %v472
      %v958 = vunpack.c.l.b16 %v473
      %v959 = vunpack.c.l.b16 %v474
      %v960 = vunpack.c.l.b16 %v475
      %v961 = vunpack.c.l.b16 %v476
      %v962 = vunpack.c.l.b16 %v477
      %v963 = vunpack.c.l.b16 %v478
      %v964 = vunpack.c.l.b16 %v479
      %v965 = vunpack.c.l.b16 %v480
      %v966 = vunpack.c.l.b16 %v481
      %v967 = vunpack.c.l.b16 %v482
      %v968 = vunpack.c.l.b16 %v483
      %v969 = vunpack.c.l.b16 %v484
      %v970 = vunpack.c.l.b16 %v485
      %v971 = vunpack.c.l.b16 %v486
      %v972 = vunpack.c.l.b16 %v487
      %v973 = vunpack.c.l.b16 %v488
      %v974 = vunpack.c.l.b16 %v489
      %v975 = vunpack.c.l.b16 %v490
      %v976 = vunpack.c.l.b16 %v491
      %v977 = vunpack.c.l.b16 %v492
      %v978 = vunpack.c.l.b16 %v493
      %v979 = vunpack.c.l.b16 %v494
      %v980 = vunpack.c.l.b16 %v495
      %v981 = vunpack.c.l.b16 %v496
      %v982 = vunpack.c.l.b16 %v497
      %v983 = vunpack.c.l.b16 %v498
      %v984 = vunpack.c.l.b16 %v499
      %v985 = vunpack.c.l.b16 %v500
      %v986 = vunpack.c.l.b16 %v501
      %v987 = vunpack.c.l.b16 %v502
      %v988 = vunpack.c.l.b16 %v503
      %v989 = vunpack.c.l.b16 %v504
      %v990 = vpack.c.b16 %v943, %v942
      %v991 = vpack.c.b16 %v945, %v944
      %v992 = vpack.c.b16 %v947, %v946
      %v993 = vpack.c.b16 %v949, %v948
      %v994 = vpack.c.b16 %v951, %v950
      %v995 = vpack.c.b16 %v953, %v952
      %v996 = vpack.c.b16 %v955, %v954
      %v997 = vpack.c.b16 %v957, %v956
      %v998 = vpack.c.b16 %v959, %v958
      %v999 = vpack.c.b16 %v961, %v960
      %v1000 = vpack.c.b16 %v963, %v962
      %v1001 = vpack.c.b16 %v965, %v964
      %v1002 = vpack.c.b16 %v967, %v966
      %v1003 = vpack.c.b16 %v969, %v968
      %v1004 = vpack.c.b16 %v971, %v970
      %v1005 = vpack.c.b16 %v973, %v972
      %v1006 = vpack.c.b16 %v975, %v974
      %v1007 = vpack.c.b16 %v977, %v976
      %v1008 = vpack.c.b16 %v979, %v978
      %v1009 = vpack.c.b16 %v981, %v980
      %v1010 = vpack.c.b16 %v983, %v982
      %v1011 = vpack.c.b16 %v985, %v984
      %v1012 = vpack.c.b16 %v987, %v986
      %v1013 = vpack.c.b16 %v989, %v988
      %1038 = vmatprep.subr.bf16.mxu0 0
      %1039 = vmatpush1.bf16.msra.mxu0 %v997
      %1040 = vmatprep.subr.bf16.mxu0 0
      %1041 = vmatpush1.bf16.msra.mxu0 %v996
      %1042 = vmatprep.subr.bf16.mxu0 0
      %1043 = vmatpush1.bf16.msra.mxu0 %v995
      %1044 = vmatprep.subr.bf16.mxu0 0
      %1045 = vmatpush1.bf16.msra.mxu0 %v994
      %1046 = vmatprep.subr.bf16.mxu0 0
      %1047 = vmatpush1.bf16.msra.mxu0 %v993
      %1048 = vmatprep.subr.bf16.mxu0 0
      %1049 = vmatpush1.bf16.msra.mxu0 %v992
      %1050 = vmatprep.subr.bf16.mxu0 0
      %1051 = vmatpush1.bf16.msra.mxu0 %v991
      %1052 = vmatprep.subr.bf16.mxu0 0
      %1053 = vmatpush1.bf16.msra.mxu0 %v990
      %1054 = vmatprep.subr.bf16.mxu0 0
      %1055 = vmatpush2.bf16.msra.mxu0 %v1005
      %1056 = vmatprep.subr.bf16.mxu0 0
      %1057 = vmatpush2.bf16.msra.mxu0 %v1004
      %1058 = vmatprep.subr.bf16.mxu0 0
      %1059 = vmatpush2.bf16.msra.mxu0 %v1003
      %1060 = vmatprep.subr.bf16.mxu0 0
      %1061 = vmatpush2.bf16.msra.mxu0 %v1002
      %1062 = vmatprep.subr.bf16.mxu0 0
      %1063 = vmatpush2.bf16.msra.mxu0 %v1001
      %1064 = vmatprep.subr.bf16.mxu0 0
      %1065 = vmatpush2.bf16.msra.mxu0 %v1000
      %1066 = vmatprep.subr.bf16.mxu0 0
      %1067 = vmatpush2.bf16.msra.mxu0 %v999
      %1068 = vmatprep.subr.bf16.mxu0 0
      %1069 = vmatpush2.bf16.msra.mxu0 %v998
      %1070 = vmatprep.mubr.bf16.mxu0 %v871
      %1071 = vmatmul.mubr.bf16.gmra.mxu0 %v870
      %v1072 = vpop.f32.mrf.mxu0
      %v1073 = vadd.f32 %v840, %v1072
      %v1074 = vpop.f32.mrf.mxu0
      %v1075 = vpop.f32.mrf.mxu0
      %v1076 = vadd.f32 %v843, %v1075
      %v1077 = vpop.f32.mrf.mxu0
      %1078 = vmatprep.mubr.bf16.mxu0 %v874
      %1079 = vmatmul.mubr.bf16.gmra.mxu0 %v873
      %v1080 = vpop.f32.mrf.mxu0
      %v1081 = vadd.f32 %v848, %v1080
      %v1082 = vpop.f32.mrf.mxu0
      %v1083 = vpop.f32.mrf.mxu0
      %v1084 = vadd.f32 %v851, %v1083
      %v1085 = vpop.f32.mrf.mxu0
      %1086 = vmatprep.mubr.bf16.mxu0 %v877
      %1087 = vmatmul.mubr.bf16.gmra.mxu0 %v876
      %v1088 = vpop.f32.mrf.mxu0
      %v1089 = vadd.f32 %v856, %v1088
      %v1090 = vpop.f32.mrf.mxu0
      %v1091 = vpop.f32.mrf.mxu0
      %v1092 = vadd.f32 %v859, %v1091
      %v1093 = vpop.f32.mrf.mxu0
      %1094 = vmatprep.mubr.bf16.mxu0 %v880
      %1095 = vmatmul.mubr.bf16.gmra.mxu0 %v879
      %v1096 = vpop.f32.mrf.mxu0
      %v1097 = vadd.f32 %v864, %v1096
      %v1098 = vpop.f32.mrf.mxu0
      %v1099 = vpop.f32.mrf.mxu0
      %v1100 = vadd.f32 %v867, %v1099
      %v1101 = vpop.f32.mrf.mxu0
      %1102 = vdwg.mxu0
      %1103 = vmatprep.subr.bf16.mxu0 0
      %1104 = vmatpush1.bf16.msra.mxu0 %v1013
      %1105 = vmatprep.subr.bf16.mxu0 0
      %1106 = vmatpush1.bf16.msra.mxu0 %v1012
      %1107 = vmatprep.subr.bf16.mxu0 0
      %1108 = vmatpush1.bf16.msra.mxu0 %v1011
      %1109 = vmatprep.subr.bf16.mxu0 0
      %1110 = vmatpush1.bf16.msra.mxu0 %v1010
      %1111 = vmatprep.subr.bf16.mxu0 0
      %1112 = vmatpush1.bf16.msra.mxu0 %v1009
      %1113 = vmatprep.subr.bf16.mxu0 0
      %1114 = vmatpush1.bf16.msra.mxu0 %v1008
      %1115 = vmatprep.subr.bf16.mxu0 0
      %1116 = vmatpush1.bf16.msra.mxu0 %v1007
      %1117 = vmatprep.subr.bf16.mxu0 0
      %1118 = vmatpush1.bf16.msra.mxu0 %v1006
      %1119 = vmatprep.subr.bf16.mxu0 0
      %1120 = vmatpush2.bf16.msra.mxu0 0
      %1121 = vmatprep.subr.bf16.mxu0 0
      %1122 = vmatpush2.bf16.msra.mxu0 0
      %1123 = vmatprep.subr.bf16.mxu0 0
      %1124 = vmatpush2.bf16.msra.mxu0 0
      %1125 = vmatprep.subr.bf16.mxu0 0
      %1126 = vmatpush2.bf16.msra.mxu0 0
      %1127 = vmatprep.subr.bf16.mxu0 0
      %1128 = vmatpush2.bf16.msra.mxu0 0
      %1129 = vmatprep.subr.bf16.mxu0 0
      %1130 = vmatpush2.bf16.msra.mxu0 0
      %1131 = vmatprep.subr.bf16.mxu0 0
      %1132 = vmatpush2.bf16.msra.mxu0 0
      %1133 = vmatprep.subr.bf16.mxu0 0
      %1134 = vmatpush2.bf16.msra.mxu0 0
      %1135 = vmatprep.mubr.bf16.mxu0 0
      %1136 = vmatmul.mubr.bf16.gmra.mxu0 %v872
      %v1137 = vpop.f32.mrf.mxu0
      %v1138 = vadd.f32 %v1073, %v1137
      %v1139 = vpop.f32.mrf.mxu0
      %v1140 = vpop.f32.mrf.mxu0
      %v1141 = vadd.f32 %v1076, %v1140
      %v1142 = vpop.f32.mrf.mxu0
      %1143 = vmatprep.mubr.bf16.mxu0 0
      %1144 = vmatmul.mubr.bf16.gmra.mxu0 %v875
      %v1145 = vpop.f32.mrf.mxu0
      %v1146 = vadd.f32 %v1081, %v1145
      %v1147 = vpop.f32.mrf.mxu0
      %v1148 = vpop.f32.mrf.mxu0
      %v1149 = vadd.f32 %v1084, %v1148
      %v1150 = vpop.f32.mrf.mxu0
      %1151 = vmatprep.mubr.bf16.mxu0 0
      %1152 = vmatmul.mubr.bf16.gmra.mxu0 %v878
      %v1153 = vpop.f32.mrf.mxu0
      %v1154 = vadd.f32 %v1089, %v1153
      %v1155 = vpop.f32.mrf.mxu0
      %v1156 = vpop.f32.mrf.mxu0
      %v1157 = vadd.f32 %v1092, %v1156
      %v1158 = vpop.f32.mrf.mxu0
      %1159 = vmatprep.mubr.bf16.mxu0 0
      %1160 = vmatmul.mubr.bf16.gmra.mxu0 %v881
      %v1161 = vpop.f32.mrf.mxu0
      %v1162 = vadd.f32 %v1097, %v1161
      %v1163 = vpop.f32.mrf.mxu0
      %v1164 = vpop.f32.mrf.mxu0
      %v1165 = vadd.f32 %v1100, %v1164
      %v1166 = vpop.f32.mrf.mxu0
      %1167 = vdwg.mxu0
      %v1168 = vld [vmem:[%s3 + $0x180] sm:$0xf]
      %v1169 = vld [vmem:[%s3 + $0x184] sm:$0xf]
      %v1170 = vld [vmem:[%s3 + $0x188] sm:$0xf]
      %v1171 = vld [vmem:[%s3 + $0x18c] sm:$0xf]
      %v1172 = vld [vmem:[%s3 + $0x190] sm:$0xf]
      %v1173 = vld [vmem:[%s3 + $0x194] sm:$0xf]
      %v1174 = vld [vmem:[%s3 + $0x198] sm:$0xf]
      %v1175 = vld [vmem:[%s3 + $0x19c] sm:$0xf]
      %v1176 = vld [vmem:[%s3 + $0x1a0] sm:$0xf]
      %v1177 = vld [vmem:[%s3 + $0x1a4] sm:$0xf]
      %v1178 = vld [vmem:[%s3 + $0x1a8] sm:$0xf]
      %v1179 = vld [vmem:[%s3 + $0x1ac] sm:$0xf]
      %v1180 = vld [vmem:[%s3 + $0x1b0] sm:$0xf]
      %v1181 = vld [vmem:[%s3 + $0x1b4] sm:$0xf]
      %v1182 = vld [vmem:[%s3 + $0x1b8] sm:$0xf]
      %v1183 = vld [vmem:[%s3 + $0x1bc] sm:$0xf]
      %v1184 = vld [vmem:[%s3 + $0x1c0] sm:$0xf]
      %v1185 = vld [vmem:[%s3 + $0x1c4] sm:$0xf]
      %v1186 = vld [vmem:[%s3 + $0x1c8] sm:$0xf]
      %v1187 = vld [vmem:[%s3 + $0x1cc] sm:$0xf]
      %v1188 = vld [vmem:[%s3 + $0x1d0] sm:$0xf]
      %v1189 = vld [vmem:[%s3 + $0x1d4] sm:$0xf]
      %v1190 = vld [vmem:[%s3 + $0x1d8] sm:$0xf]
      %v1191 = vld [vmem:[%s3 + $0x1dc] sm:$0xf]
      %v1192 = vld [vmem:[%s3 + $0x1e0] sm:$0xf]
      %v1193 = vld [vmem:[%s3 + $0x1e4] sm:$0xf]
      %v1194 = vld [vmem:[%s3 + $0x1e8] sm:$0xf]
      %v1195 = vld [vmem:[%s3 + $0x1ec] sm:$0xf]
      %v1196 = vld [vmem:[%s3 + $0x1f0] sm:$0xf]
      %v1197 = vld [vmem:[%s3 + $0x1f4] sm:$0xf]
      %v1198 = vld [vmem:[%s3 + $0x1f8] sm:$0xf]
      %v1199 = vld [vmem:[%s3 + $0x1fc] sm:$0xf]
      %v1200 = vld [vmem:[%s3 + $0x200] sm:$0xf]
      %v1201 = vld [vmem:[%s3 + $0x204] sm:$0xf]
      %v1202 = vld [vmem:[%s3 + $0x208] sm:$0xf]
      %v1203 = vld [vmem:[%s3 + $0x20c] sm:$0xf]
      %v1204 = vld [vmem:[%s3 + $0x210] sm:$0xf]
      %v1205 = vld [vmem:[%s3 + $0x214] sm:$0xf]
      %v1206 = vld [vmem:[%s3 + $0x218] sm:$0xf]
      %v1207 = vld [vmem:[%s3 + $0x21c] sm:$0xf]
      %v1208 = vld [vmem:[%s3 + $0x220] sm:$0xf]
      %v1209 = vld [vmem:[%s3 + $0x224] sm:$0xf]
      %v1210 = vld [vmem:[%s3 + $0x228] sm:$0xf]
      %v1211 = vld [vmem:[%s3 + $0x22c] sm:$0xf]
      %v1212 = vld [vmem:[%s3 + $0x230] sm:$0xf]
      %v1213 = vld [vmem:[%s3 + $0x234] sm:$0xf]
      %v1214 = vld [vmem:[%s3 + $0x238] sm:$0xf]
      %v1215 = vld [vmem:[%s3 + $0x23c] sm:$0xf]
      %v1216 = vpack.c.b16 %v433, %v521
      %v1217 = vpack.c.b16 %v434, %v522
      %v1218 = vpack.c.b16 %v435, %v523
      %v1270 = vunpack.c.l.b16 %v1168
      %v1271 = vunpack.c.l.b16 %v1169
      %v1272 = vunpack.c.l.b16 %v1170
      %v1273 = vunpack.c.l.b16 %v1171
      %v1274 = vunpack.c.l.b16 %v1172
      %v1275 = vunpack.c.l.b16 %v1173
      %v1276 = vunpack.c.l.b16 %v1174
      %v1277 = vunpack.c.l.b16 %v1175
      %v1278 = vunpack.c.l.b16 %v1176
      %v1279 = vunpack.c.l.b16 %v1177
      %v1280 = vunpack.c.l.b16 %v1178
      %v1281 = vunpack.c.l.b16 %v1179
      %v1282 = vunpack.c.l.b16 %v1180
      %v1283 = vunpack.c.l.b16 %v1181
      %v1284 = vunpack.c.l.b16 %v1182
      %v1285 = vunpack.c.l.b16 %v1183
      %v1286 = vunpack.c.l.b16 %v1184
      %v1287 = vunpack.c.l.b16 %v1185
      %v1288 = vunpack.c.l.b16 %v1186
      %v1289 = vunpack.c.l.b16 %v1187
      %v1290 = vunpack.c.l.b16 %v1188
      %v1291 = vunpack.c.l.b16 %v1189
      %v1292 = vunpack.c.l.b16 %v1190
      %v1293 = vunpack.c.l.b16 %v1191
      %v1294 = vunpack.c.l.b16 %v1192
      %v1295 = vunpack.c.l.b16 %v1193
      %v1296 = vunpack.c.l.b16 %v1194
      %v1297 = vunpack.c.l.b16 %v1195
      %v1298 = vunpack.c.l.b16 %v1196
      %v1299 = vunpack.c.l.b16 %v1197
      %v1300 = vunpack.c.l.b16 %v1198
      %v1301 = vunpack.c.l.b16 %v1199
      %v1302 = vunpack.c.l.b16 %v1200
      %v1303 = vunpack.c.l.b16 %v1201
      %v1304 = vunpack.c.l.b16 %v1202
      %v1305 = vunpack.c.l.b16 %v1203
      %v1306 = vunpack.c.l.b16 %v1204
      %v1307 = vunpack.c.l.b16 %v1205
      %v1308 = vunpack.c.l.b16 %v1206
      %v1309 = vunpack.c.l.b16 %v1207
      %v1310 = vunpack.c.l.b16 %v1208
      %v1311 = vunpack.c.l.b16 %v1209
      %v1312 = vunpack.c.l.b16 %v1210
      %v1313 = vunpack.c.l.b16 %v1211
      %v1314 = vunpack.c.l.b16 %v1212
      %v1315 = vunpack.c.l.b16 %v1213
      %v1316 = vunpack.c.l.b16 %v1214
      %v1317 = vunpack.c.l.b16 %v1215
      %v1318 = vpack.c.b16 %v1271, %v1270
      %v1319 = vpack.c.b16 %v1273, %v1272
      %v1320 = vpack.c.b16 %v1275, %v1274
      %v1321 = vpack.c.b16 %v1277, %v1276
      %v1322 = vpack.c.b16 %v1279, %v1278
      %v1323 = vpack.c.b16 %v1281, %v1280
      %v1324 = vpack.c.b16 %v1283, %v1282
      %v1325 = vpack.c.b16 %v1285, %v1284
      %v1326 = vpack.c.b16 %v1287, %v1286
      %v1327 = vpack.c.b16 %v1289, %v1288
      %v1328 = vpack.c.b16 %v1291, %v1290
      %v1329 = vpack.c.b16 %v1293, %v1292
      %v1330 = vpack.c.b16 %v1295, %v1294
      %v1331 = vpack.c.b16 %v1297, %v1296
      %v1332 = vpack.c.b16 %v1299, %v1298
      %v1333 = vpack.c.b16 %v1301, %v1300
      %v1334 = vpack.c.b16 %v1303, %v1302
      %v1335 = vpack.c.b16 %v1305, %v1304
      %v1336 = vpack.c.b16 %v1307, %v1306
      %v1337 = vpack.c.b16 %v1309, %v1308
      %v1338 = vpack.c.b16 %v1311, %v1310
      %v1339 = vpack.c.b16 %v1313, %v1312
      %v1340 = vpack.c.b16 %v1315, %v1314
      %v1341 = vpack.c.b16 %v1317, %v1316
      %1366 = vmatprep.subr.bf16.mxu0 0
      %1367 = vmatpush1.bf16.msra.mxu0 %v1325
      %1368 = vmatprep.subr.bf16.mxu0 0
      %1369 = vmatpush1.bf16.msra.mxu0 %v1324
      %1370 = vmatprep.subr.bf16.mxu0 0
      %1371 = vmatpush1.bf16.msra.mxu0 %v1323
      %1372 = vmatprep.subr.bf16.mxu0 0
      %1373 = vmatpush1.bf16.msra.mxu0 %v1322
      %1374 = vmatprep.subr.bf16.mxu0 0
      %1375 = vmatpush1.bf16.msra.mxu0 %v1321
      %1376 = vmatprep.subr.bf16.mxu0 0
      %1377 = vmatpush1.bf16.msra.mxu0 %v1320
      %1378 = vmatprep.subr.bf16.mxu0 0
      %1379 = vmatpush1.bf16.msra.mxu0 %v1319
      %1380 = vmatprep.subr.bf16.mxu0 0
      %1381 = vmatpush1.bf16.msra.mxu0 %v1318
      %1382 = vmatprep.subr.bf16.mxu0 0
      %1383 = vmatpush2.bf16.msra.mxu0 %v1333
      %1384 = vmatprep.subr.bf16.mxu0 0
      %1385 = vmatpush2.bf16.msra.mxu0 %v1332
      %1386 = vmatprep.subr.bf16.mxu0 0
      %1387 = vmatpush2.bf16.msra.mxu0 %v1331
      %1388 = vmatprep.subr.bf16.mxu0 0
      %1389 = vmatpush2.bf16.msra.mxu0 %v1330
      %1390 = vmatprep.subr.bf16.mxu0 0
      %1391 = vmatpush2.bf16.msra.mxu0 %v1329
      %1392 = vmatprep.subr.bf16.mxu0 0
      %1393 = vmatpush2.bf16.msra.mxu0 %v1328
      %1394 = vmatprep.subr.bf16.mxu0 0
      %1395 = vmatpush2.bf16.msra.mxu0 %v1327
      %1396 = vmatprep.subr.bf16.mxu0 0
      %1397 = vmatpush2.bf16.msra.mxu0 %v1326
      %1398 = vmatprep.mubr.bf16.mxu0 %v874
      %1399 = vmatmul.mubr.bf16.gmra.mxu0 %v873
      %v1400 = vpop.f32.mrf.mxu0
      %v1401 = vadd.f32 0.0, %v1400
      %v1402 = vpop.f32.mrf.mxu0
      %v1403 = vpop.f32.mrf.mxu0
      %v1404 = vadd.f32 0.0, %v1403
      %v1405 = vpop.f32.mrf.mxu0
      %1406 = vmatprep.mubr.bf16.mxu0 %v877
      %1407 = vmatmul.mubr.bf16.gmra.mxu0 %v876
      %v1408 = vpop.f32.mrf.mxu0
      %v1409 = vadd.f32 0.0, %v1408
      %v1410 = vpop.f32.mrf.mxu0
      %v1411 = vpop.f32.mrf.mxu0
      %v1412 = vadd.f32 0.0, %v1411
      %v1413 = vpop.f32.mrf.mxu0
      %1414 = vmatprep.mubr.bf16.mxu0 %v880
      %1415 = vmatmul.mubr.bf16.gmra.mxu0 %v879
      %v1416 = vpop.f32.mrf.mxu0
      %v1417 = vadd.f32 0.0, %v1416
      %v1418 = vpop.f32.mrf.mxu0
      %v1419 = vpop.f32.mrf.mxu0
      %v1420 = vadd.f32 0.0, %v1419
      %v1421 = vpop.f32.mrf.mxu0
      %1422 = vmatprep.mubr.bf16.mxu0 %v1217
      %1423 = vmatmul.mubr.bf16.gmra.mxu0 %v1216
      %v1424 = vpop.f32.mrf.mxu0
      %v1425 = vadd.f32 0.0, %v1424
      %v1426 = vpop.f32.mrf.mxu0
      %v1427 = vpop.f32.mrf.mxu0
      %v1428 = vadd.f32 0.0, %v1427
      %v1429 = vpop.f32.mrf.mxu0
      %1430 = vdwg.mxu0
      %1431 = vmatprep.subr.bf16.mxu0 0
      %1432 = vmatpush1.bf16.msra.mxu0 %v1341
      %1433 = vmatprep.subr.bf16.mxu0 0
      %1434 = vmatpush1.bf16.msra.mxu0 %v1340
      %1435 = vmatprep.subr.bf16.mxu0 0
      %1436 = vmatpush1.bf16.msra.mxu0 %v1339
      %1437 = vmatprep.subr.bf16.mxu0 0
      %1438 = vmatpush1.bf16.msra.mxu0 %v1338
      %1439 = vmatprep.subr.bf16.mxu0 0
      %1440 = vmatpush1.bf16.msra.mxu0 %v1337
      %1441 = vmatprep.subr.bf16.mxu0 0
      %1442 = vmatpush1.bf16.msra.mxu0 %v1336
      %1443 = vmatprep.subr.bf16.mxu0 0
      %1444 = vmatpush1.bf16.msra.mxu0 %v1335
      %1445 = vmatprep.subr.bf16.mxu0 0
      %1446 = vmatpush1.bf16.msra.mxu0 %v1334
      %1447 = vmatprep.subr.bf16.mxu0 0
      %1448 = vmatpush2.bf16.msra.mxu0 0
      %1449 = vmatprep.subr.bf16.mxu0 0
      %1450 = vmatpush2.bf16.msra.mxu0 0
      %1451 = vmatprep.subr.bf16.mxu0 0
      %1452 = vmatpush2.bf16.msra.mxu0 0
      %1453 = vmatprep.subr.bf16.mxu0 0
      %1454 = vmatpush2.bf16.msra.mxu0 0
      %1455 = vmatprep.subr.bf16.mxu0 0
      %1456 = vmatpush2.bf16.msra.mxu0 0
      %1457 = vmatprep.subr.bf16.mxu0 0
      %1458 = vmatpush2.bf16.msra.mxu0 0
      %1459 = vmatprep.subr.bf16.mxu0 0
      %1460 = vmatpush2.bf16.msra.mxu0 0
      %1461 = vmatprep.subr.bf16.mxu0 0
      %1462 = vmatpush2.bf16.msra.mxu0 0
      %1463 = vmatprep.mubr.bf16.mxu0 0
      %1464 = vmatmul.mubr.bf16.gmra.mxu0 %v875
      %v1465 = vpop.f32.mrf.mxu0
      %v1466 = vadd.f32 %v1401, %v1465
      %v1467 = vpop.f32.mrf.mxu0
      %v1468 = vpop.f32.mrf.mxu0
      %v1469 = vadd.f32 %v1404, %v1468
      %v1470 = vpop.f32.mrf.mxu0
      %1471 = vmatprep.mubr.bf16.mxu0 0
      %1472 = vmatmul.mubr.bf16.gmra.mxu0 %v878
      %v1473 = vpop.f32.mrf.mxu0
      %v1474 = vadd.f32 %v1409, %v1473
      %v1475 = vpop.f32.mrf.mxu0
      %v1476 = vpop.f32.mrf.mxu0
      %v1477 = vadd.f32 %v1412, %v1476
      %v1478 = vpop.f32.mrf.mxu0
      %1479 = vmatprep.mubr.bf16.mxu0 0
      %1480 = vmatmul.mubr.bf16.gmra.mxu0 %v881
      %v1481 = vpop.f32.mrf.mxu0
      %v1482 = vadd.f32 %v1417, %v1481
      %v1483 = vpop.f32.mrf.mxu0
      %v1484 = vpop.f32.mrf.mxu0
      %v1485 = vadd.f32 %v1420, %v1484
      %v1486 = vpop.f32.mrf.mxu0
      %1487 = vmatprep.mubr.bf16.mxu0 0
      %1488 = vmatmul.mubr.bf16.gmra.mxu0 %v1218
      %v1489 = vpop.f32.mrf.mxu0
      %v1490 = vadd.f32 %v1425, %v1489
      %v1491 = vpop.f32.mrf.mxu0
      %v1492 = vpop.f32.mrf.mxu0
      %v1493 = vadd.f32 %v1428, %v1492
      %v1494 = vpop.f32.mrf.mxu0
      %1495 = vdwg.mxu0
      %v1496 = vadd.f32 %v1138, %v1466
      %v1497 = vadd.f32 %v1141, %v1469
      %v1498 = vadd.f32 %v1146, %v1474
      %v1499 = vadd.f32 %v1149, %v1477
      %v1500 = vadd.f32 %v1154, %v1482
      %v1501 = vadd.f32 %v1157, %v1485
      %v1502 = vadd.f32 %v1162, %v1490
      %v1503 = vadd.f32 %v1165, %v1493
      %v1504 = vpack.c.bf16 %v1496, %v1496
      %v1505 = vpack.c.bf16 %v1497, %v1497
      %v1506 = vpack.c.bf16 %v1498, %v1498
      %v1507 = vpack.c.bf16 %v1499, %v1499
      %v1508 = vpack.c.bf16 %v1500, %v1500
      %v1509 = vpack.c.bf16 %v1501, %v1501
      %v1510 = vpack.c.bf16 %v1502, %v1502
      %v1511 = vpack.c.bf16 %v1503, %v1503
      %1512 = vst [vmem:[%s231] sm:$0xf] %v1504
      %1513 = vst [vmem:[%s231 + $0x4] sm:$0xf] %v1505
      %1514 = vst [vmem:[%s231 + $0x8] sm:$0xf] %v1506
      %1515 = vst [vmem:[%s231 + $0xc] sm:$0xf] %v1507
      %1516 = vst [vmem:[%s231 + $0x10] sm:$0xf] %v1508
      %1517 = vst [vmem:[%s231 + $0x14] sm:$0xf] %v1509
      %1518 = vst [vmem:[%s231 + $0x18] sm:$0xf] %v1510
      %1519 = vst [vmem:[%s231 + $0x1c] sm:$0xf] %v1511
      %v1520 = vadd.f32 %v1496, %v1497
      %v1521 = vadd.f32 %v1520, %v1498
      %v1522 = vadd.f32 %v1521, %v1499
      %v1523 = vadd.f32 %v1522, %v1500
      %v1524 = vadd.f32 %v1523, %v1501
      %v1525 = vadd.f32 %v1524, %v1502
      %v1526 = vadd.f32 %v1525, %v1503
      %v1527 = vrot.slane %v1526, 4
      %v1528 = vadd.f32 %v1526, %v1527
      %v1529 = vrot.slane %v1528, 2
      %v1530 = vadd.f32 %v1528, %v1529
      %v1531 = vrot.slane %v1530, 1
      %v1532 = vadd.f32 %v1530, %v1531
      %v1533 = vmul.f32 %v1496, %v1496
      %v1534 = vmul.f32 %v1497, %v1497
      %v1535 = vmul.f32 %v1498, %v1498
      %v1536 = vmul.f32 %v1499, %v1499
      %v1537 = vmul.f32 %v1500, %v1500
      %v1538 = vmul.f32 %v1501, %v1501
      %v1539 = vmul.f32 %v1502, %v1502
      %v1540 = vmul.f32 %v1503, %v1503
      %v1541 = vadd.f32 %v1533, %v1534
      %v1542 = vadd.f32 %v1541, %v1535
      %v1543 = vadd.f32 %v1542, %v1536
      %v1544 = vadd.f32 %v1543, %v1537
      %v1545 = vadd.f32 %v1544, %v1538
      %v1546 = vadd.f32 %v1545, %v1539
      %v1547 = vadd.f32 %v1546, %v1540
      %v1548 = vrot.slane %v1547, 4
      %v1549 = vadd.f32 %v1547, %v1548
      %v1550 = vrot.slane %v1549, 2
      %v1551 = vadd.f32 %v1549, %v1550
      %v1552 = vrot.slane %v1551, 1
      %v1553 = vadd.f32 %v1551, %v1552
      %vm1554 = vcmask 1040384
      %v1555 = vsel %vm1554, %v1532, %v1553
      %vm1556 = vcmask 1041408
      %v1557 = vsel %vm1556, %v1555, 0.0
      %1558 = vst [vmem:[%s235] sm:$0xff] %v1557
      %p1559 = scmp.lt.s32.totalorder %s17, 1
      %s1560 = scalar_select %p1559, %s17, 1
      %s1561 = smul.addr %s1560, 8
      %s1562 = smul.addr %s1561, 4
      %s1563 = scalar_lea.vmem %s4, %s1562
      %p1564 = scmp.lt.s32.totalorder %s17, 1
      %s1565 = scalar_select %p1564, %s17, 1
      %s1566 = smul.addr %s1565, 8
      %s1567 = scalar_lea.vmem %s5, %s1566
      // Predicated region
      $region37: #{down_forward.3} parent=35 // pred_check
        %p1568 = pneg %p124
      $region38: #{down_forward.3} parent=35 // pred_check_branch
        %1570 = sbr.rel (%p1568) target = $region40
      $region39: #{down_forward.3} parent=35 // pred_region
        _
      $region40: #{down_forward.3} parent=35 // pred_fallthru
        _
      // Predicated region
      $region41: #{down_forward.3} parent=35 // pred_check
        %p1571 = pneg %p150
      $region42: #{down_forward.3} parent=35 // pred_check_branch
        %1573 = sbr.rel (%p1571) target = $region44
      $region43: #{down_forward.3} parent=35 // pred_region
        _
      $region44: #{down_forward.3} parent=35 // pred_fallthru
        _
    $region36: #{down_forward.3} parent=5 // pred_fallthru
      _
    %p1574 = scmp.le.s32.totalorder 2, %s12
    // Predicated region
    $region45: #{down_forward.3} parent=5 // pred_check
      %p1575 = pneg %p1574
    $region46: #{down_forward.3} parent=5 // pred_check_branch
      %1577 = sbr.rel (%p1575) target = $region48
    $region47: #{down_forward.3} parent=5 // pred_region
      %s1578 = ssub.s32 %s12, 2
      // Predicated region
      $region49: #{down_forward.3} parent=47 // pred_check
        %p1579 = pneg %p130
      $region50: #{down_forward.3} parent=47 // pred_check_branch
        %1581 = sbr.rel (%p1579) target = $region52
      $region51: #{down_forward.3} parent=47 // pred_region
        %p1582 = scmp.lt.s32.totalorder %s18, 1
        %s1583 = scalar_select %p1582, %s18, 1
        %s1584 = smul.addr %s1583, 8
        %s1585 = smul.addr %s1584, 4
        %s1586 = scalar_lea.vmem %s4, %s1585
      $region52: #{down_forward.3} parent=47 // pred_fallthru
        _
      // Predicated region
      $region53: #{down_forward.3} parent=47 // pred_check
        %p1587 = pneg %p156
      $region54: #{down_forward.3} parent=47 // pred_check_branch
        %1589 = sbr.rel (%p1587) target = $region56
      $region55: #{down_forward.3} parent=47 // pred_region
        %p1590 = scmp.lt.s32.totalorder %s18, 1
        %s1591 = scalar_select %p1590, %s18, 1
        %s1592 = smul.addr %s1591, 8
        %s1593 = scalar_lea.vmem %s5, %s1592
      $region56: #{down_forward.3} parent=47 // pred_fallthru
        _
    $region48: #{down_forward.3} parent=5 // pred_fallthru
      _
  $region6: #{down_forward.3} parent=0 // loop_footer
    %s16 = sadd.s32 1, %s12
  $region7: #{down_forward.3} parent=0 // loop_footer_branch
    %11 = sbr.rel target = $region3
  $region8: #{down_forward.3} parent=0 // loop_exit
    _

</llo_original>
